<compile_context>
chip_gen: v7x
topology: tpu7x:2x2x1
jax: 0.10.0
libtpu: 0.0.40
codegen_flags: <defaults>
</compile_context>

<pallas_src>
import functools

import jax
import jax.numpy as jnp
import numpy as np
from jax.experimental import pallas as pl
from jax.experimental.pallas import tpu as pltpu


def _gaussian_1d(kernel_len=16, nsig=10):
    """cv2.getGaussianKernel(kernel_len, nsig) (sigma>0 branch), as Python float constants."""
    i = np.arange(kernel_len, dtype=np.float64)
    center = (kernel_len - 1) / 2.0
    g = np.exp(-((i - center) ** 2) / (2.0 * nsig * nsig))
    g = g / g.sum()
    return tuple(float(v) for v in np.asarray(g, dtype=np.float32))


def get_gaussian_kernel(kernel_len=16, nsig=10):
    """2-D Gaussian weight (outer product), float32 — used only by the pure-JAX reference."""
    g = np.asarray(_gaussian_1d(kernel_len, nsig), dtype=np.float32)
    return jnp.asarray(np.outer(g, g), dtype=jnp.float32)


def _gauss_sep_kernel(x_ref, o_ref, *, g, K):
    # x_ref: (H, W, T) unpadded block, channels (T) on the lane dim.
    # o_ref: (Ho, Wo, T) output block.
    H, W, T = x_ref.shape
    Ho, Wo, _ = o_ref.shape
    p = K // 2

    x = x_ref[...].astype(jnp.float32)  # (H, W, T)

    # Replication pad along H — done in VMEM/vregs only, never touches HBM.
    if p > 0:
        top = jnp.broadcast_to(x[0:1, :, :], (p, W, T))
        bot = jnp.broadcast_to(x[H - 1:H, :, :], (p, W, T))
        xh = jnp.concatenate([top, x, bot], axis=0)  # (H + 2p, W, T)
    else:
        xh = x

    # Vertical 1-D pass: K FMAs, shifts along the leading (cheap, untiled) axis.
    acc_v = g[0] * xh[0:Ho, :, :]
    for ki in range(1, K):
        acc_v = acc_v + g[ki] * xh[ki:ki + Ho, :, :]  # (Ho, W, T)

    # Replication pad along W (sublane axis).
    if p > 0:
        left = jnp.broadcast_to(acc_v[:, 0:1, :], (Ho, p, T))
        right = jnp.broadcast_to(acc_v[:, W - 1:W, :], (Ho, p, T))
        xw = jnp.concatenate([left, acc_v, right], axis=1)  # (Ho, W + 2p, T)
    else:
        xw = acc_v

    # Horizontal 1-D pass: K FMAs, shifts along the sublane axis (no lane shifts).
    acc = g[0] * xw[:, 0:Wo, :]
    for kj in range(1, K):
        acc = acc + g[kj] * xw[:, kj:kj + Wo, :]  # (Ho, Wo, T)

    o_ref[...] = acc.astype(o_ref.dtype)


def _choose_tile_nc(nc, h, w, budget_bytes=8 << 20):
    """Largest divisor of nc that keeps >= 2 grid steps (v7x megacore) and a rough
    per-block VMEM footprint under budget (sized for v7x's smaller 64 MiB VMEM)."""
    per_ch = 8 * h * w * 4  # input block + padded temps + output, f32, ~double-buffered
    cap = max(1, budget_bytes // per_ch)
    if nc == 1:
        return 1
    best = 1
    for d in range(1, nc):  # d < nc  =>  at least 2 grid steps
        if nc % d == 0 and d <= cap:
            best = d
    return best


def gaussian_kernel_forward(x, kernel_len=8, nsig=20):
    """x: (N, C, H, W) float32.  Equivalent to Gaussian_kernel(kernel_len, nsig)(x)."""
    N, C, H, W = x.shape
    K = int(kernel_len)
    p = K // 2
    Ho = H + 2 * p - K + 1
    Wo = W + 2 * p - K + 1
    g = _gaussian_1d(K, nsig)  # baked-in 1-D taps (separable)

    NC = N * C
    T = _choose_tile_nc(NC, H, W)
    G = NC // T

    # NCHW -> (G, H, W, T): fused channel axis on the lane dim; one (H, W, T) slab per grid step.
    # TODO(synk): add spatial (H) tiling with halo for images whose per-channel block exceeds VMEM.
    xt = x.reshape(G, T, H, W).transpose(0, 2, 3, 1)

    out = pl.pallas_call(
        functools.partial(_gauss_sep_kernel, g=g, K=K),
        out_shape=jax.ShapeDtypeStruct((G, Ho, Wo, T), x.dtype),
        grid=(G,),
        in_specs=[pl.BlockSpec((None, H, W, T), lambda i: (i, 0, 0, 0))],
        out_specs=pl.BlockSpec((None, Ho, Wo, T), lambda i: (i, 0, 0, 0)),
        compiler_params=pltpu.CompilerParams(
            dimension_semantics=("parallel",),
            vmem_limit_bytes=32 * 1024 * 1024,
        ),
    )(xt)

    # (G, Ho, Wo, T) -> (N, C, Ho, Wo)
    return out.transpose(0, 3, 1, 2).reshape(N, C, Ho, Wo)


def _reference(x, weight2d):
    # Pure-JAX reference: edge pad + per-channel 2-D VALID cross-correlation.
    K = weight2d.shape[0]
    p = K // 2
    xp = jnp.pad(x, ((0, 0), (0, 0), (p, p), (p, p)), mode="edge")
    w = weight2d[None, None, :, :]
    outs = []
    for c in range(x.shape[1]):
        outs.append(
            jax.lax.conv_general_dilated(
                xp[:, c:c + 1], w, window_strides=(1, 1), padding="VALID",
                dimension_numbers=("NCHW", "OIHW", "NCHW"),
            )
        )
    return jnp.concatenate(outs, axis=1)


if __name__ == "__main__":
    kernel_len = 8
    nsig = 20  # module default

    key = jax.random.PRNGKey(0)
    x = jax.random.normal(key, (2, 4, 16, 16), dtype=jnp.float32)

    out = gaussian_kernel_forward(x, kernel_len=kernel_len, nsig=nsig)
    out = jax.block_until_ready(out)

    ref = jax.block_until_ready(_reference(x, get_gaussian_kernel(kernel_len, nsig)))
    np.testing.assert_allclose(np.asarray(out), np.asarray(ref), rtol=1e-5, atol=1e-5)

    assert out.shape == (2, 4, 17, 17), out.shape
    print("KERNEL_OK")
</pallas_src>

<mosaic_0001>
module attributes {stable_mosaic.version = 11 : i64} {
  func.func @_gauss_sep_kernel(%arg0: i32, %arg1: memref<1x16x16x4xf32, #tpu.memory_space<vmem>>, %arg2: memref<1x17x17x4xf32, #tpu.memory_space<vmem>>) attributes {dimension_semantics = [#tpu.dimension_semantics<parallel>], iteration_bounds = array<i64: 2>, scalar_prefetch = 0 : i64, scratch_operands = 0 : i64, tpu.core_type = #tpu.core_type<tc>, window_params = [{transform_indices = @transform_0, window_bounds = array<i64: 1, 16, 16, 4>}, {transform_indices = @transform_1, window_bounds = array<i64: 1, 17, 17, 4>}]} {
    %c0 = arith.constant 0 : index
    %c0_0 = arith.constant 0 : index
    %c0_1 = arith.constant 0 : index
    %c0_2 = arith.constant 0 : index
    %0 = vector.load %arg1[%c0, %c0_0, %c0_1, %c0_2] : memref<1x16x16x4xf32, #tpu.memory_space<vmem>>, vector<1x16x16x4xf32>
    %1 = vector.shape_cast %0 : vector<1x16x16x4xf32> to vector<16x16x4xf32>
    %2 = vector.extract_strided_slice %1 {offsets = [0, 0, 0], sizes = [1, 16, 4], strides = [1, 1, 1]} : vector<16x16x4xf32> to vector<1x16x4xf32>
    %3 = vector.shape_cast %2 : vector<1x16x4xf32> to vector<1x16x4xf32>
    %4 = vector.broadcast %3 : vector<1x16x4xf32> to vector<4x16x4xf32>
    %5 = vector.extract_strided_slice %1 {offsets = [15, 0, 0], sizes = [1, 16, 4], strides = [1, 1, 1]} : vector<16x16x4xf32> to vector<1x16x4xf32>
    %6 = vector.shape_cast %5 : vector<1x16x4xf32> to vector<1x16x4xf32>
    %7 = vector.broadcast %6 : vector<1x16x4xf32> to vector<4x16x4xf32>
    %8 = tpu.concatenate %4, %1, %7 in 0 : vector<4x16x4xf32>, vector<16x16x4xf32>, vector<4x16x4xf32> -> vector<24x16x4xf32>
    %9 = vector.extract_strided_slice %8 {offsets = [0, 0, 0], sizes = [17, 16, 4], strides = [1, 1, 1]} : vector<24x16x4xf32> to vector<17x16x4xf32>
    %cst = arith.constant 0.123908989 : f32
    %10 = vector.broadcast %cst : f32 to vector<17x16x4xf32>
    %11 = arith.mulf %10, %9 : vector<17x16x4xf32>
    %12 = vector.extract_strided_slice %8 {offsets = [1, 0, 0], sizes = [17, 16, 4], strides = [1, 1, 1]} : vector<24x16x4xf32> to vector<17x16x4xf32>
    %cst_3 = arith.constant 0.124841802 : f32
    %13 = vector.broadcast %cst_3 : f32 to vector<17x16x4xf32>
    %14 = arith.mulf %13, %12 : vector<17x16x4xf32>
    %15 = arith.addf %11, %14 : vector<17x16x4xf32>
    %16 = vector.extract_strided_slice %8 {offsets = [2, 0, 0], sizes = [17, 16, 4], strides = [1, 1, 1]} : vector<24x16x4xf32> to vector<17x16x4xf32>
    %cst_4 = arith.constant 0.125467569 : f32
    %17 = vector.broadcast %cst_4 : f32 to vector<17x16x4xf32>
    %18 = arith.mulf %17, %16 : vector<17x16x4xf32>
    %19 = arith.addf %15, %18 : vector<17x16x4xf32>
    %20 = vector.extract_strided_slice %8 {offsets = [3, 0, 0], sizes = [17, 16, 4], strides = [1, 1, 1]} : vector<24x16x4xf32> to vector<17x16x4xf32>
    %cst_5 = arith.constant 0.12578164 : f32
    %21 = vector.broadcast %cst_5 : f32 to vector<17x16x4xf32>
    %22 = arith.mulf %21, %20 : vector<17x16x4xf32>
    %23 = arith.addf %19, %22 : vector<17x16x4xf32>
    %24 = vector.extract_strided_slice %8 {offsets = [4, 0, 0], sizes = [17, 16, 4], strides = [1, 1, 1]} : vector<24x16x4xf32> to vector<17x16x4xf32>
    %cst_6 = arith.constant 0.12578164 : f32
    %25 = vector.broadcast %cst_6 : f32 to vector<17x16x4xf32>
    %26 = arith.mulf %25, %24 : vector<17x16x4xf32>
    %27 = arith.addf %23, %26 : vector<17x16x4xf32>
    %28 = vector.extract_strided_slice %8 {offsets = [5, 0, 0], sizes = [17, 16, 4], strides = [1, 1, 1]} : vector<24x16x4xf32> to vector<17x16x4xf32>
    %cst_7 = arith.constant 0.125467569 : f32
    %29 = vector.broadcast %cst_7 : f32 to vector<17x16x4xf32>
    %30 = arith.mulf %29, %28 : vector<17x16x4xf32>
    %31 = arith.addf %27, %30 : vector<17x16x4xf32>
    %32 = vector.extract_strided_slice %8 {offsets = [6, 0, 0], sizes = [17, 16, 4], strides = [1, 1, 1]} : vector<24x16x4xf32> to vector<17x16x4xf32>
    %cst_8 = arith.constant 0.124841802 : f32
    %33 = vector.broadcast %cst_8 : f32 to vector<17x16x4xf32>
    %34 = arith.mulf %33, %32 : vector<17x16x4xf32>
    %35 = arith.addf %31, %34 : vector<17x16x4xf32>
    %36 = vector.extract_strided_slice %8 {offsets = [7, 0, 0], sizes = [17, 16, 4], strides = [1, 1, 1]} : vector<24x16x4xf32> to vector<17x16x4xf32>
    %cst_9 = arith.constant 0.123908989 : f32
    %37 = vector.broadcast %cst_9 : f32 to vector<17x16x4xf32>
    %38 = arith.mulf %37, %36 : vector<17x16x4xf32>
    %39 = arith.addf %35, %38 : vector<17x16x4xf32>
    %40 = vector.extract_strided_slice %39 {offsets = [0, 0, 0], sizes = [17, 1, 4], strides = [1, 1, 1]} : vector<17x16x4xf32> to vector<17x1x4xf32>
    %41 = vector.shape_cast %40 : vector<17x1x4xf32> to vector<17x1x4xf32>
    %42 = vector.broadcast %41 : vector<17x1x4xf32> to vector<17x4x4xf32>
    %43 = vector.extract_strided_slice %39 {offsets = [0, 15, 0], sizes = [17, 1, 4], strides = [1, 1, 1]} : vector<17x16x4xf32> to vector<17x1x4xf32>
    %44 = vector.shape_cast %43 : vector<17x1x4xf32> to vector<17x1x4xf32>
    %45 = vector.broadcast %44 : vector<17x1x4xf32> to vector<17x4x4xf32>
    %46 = tpu.concatenate %42, %39, %45 in 1 : vector<17x4x4xf32>, vector<17x16x4xf32>, vector<17x4x4xf32> -> vector<17x24x4xf32>
    %47 = vector.extract_strided_slice %46 {offsets = [0, 0, 0], sizes = [17, 17, 4], strides = [1, 1, 1]} : vector<17x24x4xf32> to vector<17x17x4xf32>
    %cst_10 = arith.constant 0.123908989 : f32
    %48 = vector.broadcast %cst_10 : f32 to vector<17x17x4xf32>
    %49 = arith.mulf %48, %47 : vector<17x17x4xf32>
    %50 = vector.extract_strided_slice %46 {offsets = [0, 1, 0], sizes = [17, 17, 4], strides = [1, 1, 1]} : vector<17x24x4xf32> to vector<17x17x4xf32>
    %cst_11 = arith.constant 0.124841802 : f32
    %51 = vector.broadcast %cst_11 : f32 to vector<17x17x4xf32>
    %52 = arith.mulf %51, %50 : vector<17x17x4xf32>
    %53 = arith.addf %49, %52 : vector<17x17x4xf32>
    %54 = vector.extract_strided_slice %46 {offsets = [0, 2, 0], sizes = [17, 17, 4], strides = [1, 1, 1]} : vector<17x24x4xf32> to vector<17x17x4xf32>
    %cst_12 = arith.constant 0.125467569 : f32
    %55 = vector.broadcast %cst_12 : f32 to vector<17x17x4xf32>
    %56 = arith.mulf %55, %54 : vector<17x17x4xf32>
    %57 = arith.addf %53, %56 : vector<17x17x4xf32>
    %58 = vector.extract_strided_slice %46 {offsets = [0, 3, 0], sizes = [17, 17, 4], strides = [1, 1, 1]} : vector<17x24x4xf32> to vector<17x17x4xf32>
    %cst_13 = arith.constant 0.12578164 : f32
    %59 = vector.broadcast %cst_13 : f32 to vector<17x17x4xf32>
    %60 = arith.mulf %59, %58 : vector<17x17x4xf32>
    %61 = arith.addf %57, %60 : vector<17x17x4xf32>
    %62 = vector.extract_strided_slice %46 {offsets = [0, 4, 0], sizes = [17, 17, 4], strides = [1, 1, 1]} : vector<17x24x4xf32> to vector<17x17x4xf32>
    %cst_14 = arith.constant 0.12578164 : f32
    %63 = vector.broadcast %cst_14 : f32 to vector<17x17x4xf32>
    %64 = arith.mulf %63, %62 : vector<17x17x4xf32>
    %65 = arith.addf %61, %64 : vector<17x17x4xf32>
    %66 = vector.extract_strided_slice %46 {offsets = [0, 5, 0], sizes = [17, 17, 4], strides = [1, 1, 1]} : vector<17x24x4xf32> to vector<17x17x4xf32>
    %cst_15 = arith.constant 0.125467569 : f32
    %67 = vector.broadcast %cst_15 : f32 to vector<17x17x4xf32>
    %68 = arith.mulf %67, %66 : vector<17x17x4xf32>
    %69 = arith.addf %65, %68 : vector<17x17x4xf32>
    %70 = vector.extract_strided_slice %46 {offsets = [0, 6, 0], sizes = [17, 17, 4], strides = [1, 1, 1]} : vector<17x24x4xf32> to vector<17x17x4xf32>
    %cst_16 = arith.constant 0.124841802 : f32
    %71 = vector.broadcast %cst_16 : f32 to vector<17x17x4xf32>
    %72 = arith.mulf %71, %70 : vector<17x17x4xf32>
    %73 = arith.addf %69, %72 : vector<17x17x4xf32>
    %74 = vector.extract_strided_slice %46 {offsets = [0, 7, 0], sizes = [17, 17, 4], strides = [1, 1, 1]} : vector<17x24x4xf32> to vector<17x17x4xf32>
    %cst_17 = arith.constant 0.123908989 : f32
    %75 = vector.broadcast %cst_17 : f32 to vector<17x17x4xf32>
    %76 = arith.mulf %75, %74 : vector<17x17x4xf32>
    %77 = arith.addf %73, %76 : vector<17x17x4xf32>
    %c0_18 = arith.constant 0 : index
    %c0_19 = arith.constant 0 : index
    %c0_20 = arith.constant 0 : index
    %c0_21 = arith.constant 0 : index
    %78 = vector.load %arg2[%c0_18, %c0_19, %c0_20, %c0_21] : memref<1x17x17x4xf32, #tpu.memory_space<vmem>>, vector<1x17x17x4xf32>
    %79 = vector.shape_cast %78 : vector<1x17x17x4xf32> to vector<17x17x4xf32>
    %80 = vector.shape_cast %77 : vector<17x17x4xf32> to vector<1x17x17x4xf32>
    tpu.vector_store %arg2[%c0_18, %c0_19, %c0_20, %c0_21], %80 {strides = array<i32>} : memref<1x17x17x4xf32, #tpu.memory_space<vmem>>, vector<1x17x17x4xf32>,
    return
  }
  func.func @transform_0(%arg0: i32) -> (i32, i32, i32, i32) {
    %c0_i32 = arith.constant 0 : i32
    %c0_i32_0 = arith.constant 0 : i32
    %c0_i32_1 = arith.constant 0 : i32
    %c0_i32_2 = arith.constant 0 : i32
    return %arg0, %c0_i32, %c0_i32_0, %c0_i32_1 : i32, i32, i32, i32
  }
  func.func @transform_1(%arg0: i32) -> (i32, i32, i32, i32) {
    %c0_i32 = arith.constant 0 : i32
    %c0_i32_0 = arith.constant 0 : i32
    %c0_i32_1 = arith.constant 0 : i32
    %c0_i32_2 = arith.constant 0 : i32
    return %arg0, %c0_i32, %c0_i32_0, %c0_i32_1 : i32, i32, i32, i32
  }
}

</mosaic_0001>

<llo_original>
// kernel: tpu_custom_call.1
$region0: #{tpu_custom_call.1}
  #allocation0 [shape = 'u32[]', space=smem, size = 0x4, offset = 0x4, fixed_abs, tag = 'smem constant byte address 0x4 - core index']
  #allocation1 [shape = 'u32[144,128]{1,0:T(1,128)}', space=vmem, size = 0x12000, scoped, tag = 'internal scratch']
  %s0 = inlined_call_operand.vmem [shape: f32[2,16,16,4], index: 0, kind: input, shape index: {}]
  %s1 = inlined_call_operand.vmem [shape: f32[2,17,17,4], index: 1, kind: output, shape index: {}]
  %s2 = sld [smem:[#allocation0]]
  $region37: #{tpu_custom_call.1} parent=0
    _
  %s4 = ssub.s32 1, %s2
  %s5 = scalar_select 0, %s4, %s2
  loop: start=0, step=1, limit=4
  $region2: #{tpu_custom_call.1} parent=0 // loop_pre_header
    _
  $region3: #{tpu_custom_call.1} parent=0 // loop_header
    %s7 = sphi 0, %s11
    %p8 = scmp.ge.s32.totalorder %s7, 4
    %s17 = sphi 0, %s19
    %s20 = sphi 0, %s17
    %s21 = sphi 0, %s20
    %s37 = sphi 0, %s21
    %s43 = sphi 0, %s45
    %s46 = sphi 0, %s43
    %s47 = sphi 0, %s46
    %s63 = sphi 0, %s47
  $region4: #{tpu_custom_call.1} parent=0 // loop_header_branch
    %10 = sbr.rel (%p8) target = $region8
  $region5: #{tpu_custom_call.1} parent=0 // loop_body
    %s12 = ssub.s32 %s7, 1
    %s13 = ssub.s32 %s7, 2
    %s14 = sadd.s32 %s7, 1
    %s15 = ssub.s32 %s7, %s14
    %p16 = scmp.eq.s32.totalorder %s15, 0
    %s18 = sadd.s32 %s17, 1
    %s19 = scalar_select %p16, %s17, %s18
    %p22 = pneg %p16
    %p23 = scmp.eq.s32.totalorder %s7, 1
    %p24 = por %p22, %p23
    %p25 = scmp.ne.s32.totalorder %s17, %s20
    %p26 = scmp.eq.s32.totalorder %s7, 0
    %p27 = por %p25, %p26
    %p28 = scmp.ne.s32.totalorder %s17, %s20
    %p29 = scmp.eq.s32.totalorder %s12, 1
    %p30 = por %p28, %p29
    %p31 = scmp.ne.s32.totalorder %s20, %s21
    %p32 = scmp.eq.s32.totalorder %s12, 0
    %p33 = por %p31, %p32
    %p34 = scmp.ne.s32.totalorder %s20, %s21
    %p35 = scmp.eq.s32.totalorder %s13, 1
    %p36 = por %p34, %p35
    %p38 = scmp.ne.s32.totalorder %s21, %s37
    %p39 = scmp.eq.s32.totalorder %s13, 0
    %p40 = por %p38, %p39
    %s41 = ssub.s32 %s7, %s14
    %p42 = scmp.eq.s32.totalorder %s41, 0
    %s44 = sadd.s32 %s43, 1
    %s45 = scalar_select %p42, %s43, %s44
    %p48 = pneg %p42
    %p49 = scmp.eq.s32.totalorder %s7, 1
    %p50 = por %p48, %p49
    %p51 = scmp.ne.s32.totalorder %s43, %s46
    %p52 = scmp.eq.s32.totalorder %s7, 0
    %p53 = por %p51, %p52
    %p54 = scmp.ne.s32.totalorder %s43, %s46
    %p55 = scmp.eq.s32.totalorder %s12, 1
    %p56 = por %p54, %p55
    %p57 = scmp.ne.s32.totalorder %s46, %s47
    %p58 = scmp.eq.s32.totalorder %s12, 0
    %p59 = por %p57, %p58
    %p60 = scmp.ne.s32.totalorder %s46, %s47
    %p61 = scmp.eq.s32.totalorder %s13, 1
    %p62 = por %p60, %p61
    %p64 = scmp.ne.s32.totalorder %s47, %s63
    %p65 = scmp.eq.s32.totalorder %s13, 0
    %p66 = por %p64, %p65
    %p67 = scmp.le.s32.totalorder 1, %s7
    %p68 = scmp.lt.s32.totalorder %s7, 3
    %p69 = pnand %p67, %p68
    %p70 = pneg %p69
    // Predicated region
    $region9: #{tpu_custom_call.1} parent=5 // pred_check
      _
    $region10: #{tpu_custom_call.1} parent=5 // pred_check_branch
      %72 = sbr.rel (%p69) target = $region12
    $region11: #{tpu_custom_call.1} parent=5 // pred_region
      %s73 = ssub.s32 %s7, 1
    $region12: #{tpu_custom_call.1} parent=5 // pred_fallthru
      _
    %p74 = scmp.lt.s32.totalorder %s7, 2
    // Predicated region
    $region13: #{tpu_custom_call.1} parent=5 // pred_check
      %p75 = pneg %p74
    $region14: #{tpu_custom_call.1} parent=5 // pred_check_branch
      %77 = sbr.rel (%p75) target = $region16
    $region15: #{tpu_custom_call.1} parent=5 // pred_region
      // Predicated region
      $region17: #{tpu_custom_call.1} parent=15 // pred_check
        %p78 = pneg %p27
      $region18: #{tpu_custom_call.1} parent=15 // pred_check_branch
        %80 = sbr.rel (%p78) target = $region20
      $region19: #{tpu_custom_call.1} parent=15 // pred_region
        %p81 = scmp.lt.s32.totalorder %s7, 1
        %s82 = scalar_select %p81, %s7, 1
        %s83 = smul.addr %s82, 32
        %s84 = smul.addr %s83, 8
        %s85 = scalar_lea.vmem %s0, %s84
      $region20: #{tpu_custom_call.1} parent=15 // pred_fallthru
        _
    $region16: #{tpu_custom_call.1} parent=5 // pred_fallthru
      _
    %p86 = scmp.le.s32.totalorder 1, %s7
    %p87 = scmp.lt.s32.totalorder %s7, 3
    %p88 = pnand %p86, %p87
    %p89 = pneg %p88
    // Predicated region
    $region21: #{tpu_custom_call.1} parent=5 // pred_check
      _
    $region22: #{tpu_custom_call.1} parent=5 // pred_check_branch
      %91 = sbr.rel (%p88) target = $region24
    $region23: #{tpu_custom_call.1} parent=5 // pred_region
      %s92 = ssub.s32 %s7, 1
      %p93 = scmp.lt.s32.totalorder %s12, 1
      %s94 = scalar_select %p93, %s12, 1
      %s95 = smul.addr %s94, 32
      %s96 = smul.addr %s95, 8
      %s97 = scalar_lea.vmem %s0, %s96
      %p98 = pneg %p33
      %p99 = pneg %p30
      %p100 = pneg %p59
      %p101 = pneg %p56
      %p102 = scmp.lt.s32.totalorder %s12, 1
      %s103 = scalar_select %p102, %s12, 1
      %s104 = smul.addr %s103, 51
      %s105 = smul.addr %s104, 8
      %s106 = scalar_lea.vmem %s1, %s105
      %p107 = scmp.lt.s32.totalorder %s12, 1
      %s108 = scalar_select %p107, %s12, 1
      %s109 = smul.addr %s108, 32
      %s110 = smul.addr %s109, 8
      %s111 = scalar_lea.vmem %s0, %s110
      %p112 = scmp.lt.s32.totalorder %s12, 1
      %s113 = scalar_select %p112, %s12, 1
      %s114 = smul.addr %s113, 51
      %s115 = smul.addr %s114, 8
      %s116 = scalar_lea.vmem %s1, %s115
      %v117 = vld [vmem:[%s111] sm:$0xff]
      %v118 = vld [vmem:[%s111 + $0x8] sm:$0xff]
      %v119 = vld [vmem:[%s111 + $0x10] sm:$0xff]
      %v120 = vld [vmem:[%s111 + $0x18] sm:$0xff]
      %v121 = vld [vmem:[%s111 + $0x20] sm:$0xff]
      %v122 = vld [vmem:[%s111 + $0x28] sm:$0xff]
      %v123 = vld [vmem:[%s111 + $0x30] sm:$0xff]
      %v124 = vld [vmem:[%s111 + $0x38] sm:$0xff]
      %v125 = vld [vmem:[%s111 + $0x40] sm:$0xff]
      %v126 = vld [vmem:[%s111 + $0x48] sm:$0xff]
      %v127 = vld [vmem:[%s111 + $0x50] sm:$0xff]
      %v128 = vld [vmem:[%s111 + $0x58] sm:$0xff]
      %v129 = vld [vmem:[%s111 + $0x60] sm:$0xff]
      %v130 = vld [vmem:[%s111 + $0x68] sm:$0xff]
      %v131 = vld [vmem:[%s111 + $0x70] sm:$0xff]
      %v132 = vld [vmem:[%s111 + $0x78] sm:$0xff]
      %v133 = vld [vmem:[%s111 + $0x80] sm:$0xff]
      %v134 = vld [vmem:[%s111 + $0x88] sm:$0xff]
      %v135 = vld [vmem:[%s111 + $0x90] sm:$0xff]
      %v136 = vld [vmem:[%s111 + $0x98] sm:$0xff]
      %v137 = vld [vmem:[%s111 + $0xa0] sm:$0xff]
      %v138 = vld [vmem:[%s111 + $0xa8] sm:$0xff]
      %v139 = vld [vmem:[%s111 + $0xb0] sm:$0xff]
      %v140 = vld [vmem:[%s111 + $0xb8] sm:$0xff]
      %v141 = vld [vmem:[%s111 + $0xc0] sm:$0xff]
      %v142 = vld [vmem:[%s111 + $0xc8] sm:$0xff]
      %v143 = vld [vmem:[%s111 + $0xd0] sm:$0xff]
      %v144 = vld [vmem:[%s111 + $0xd8] sm:$0xff]
      %v145 = vld [vmem:[%s111 + $0xe0] sm:$0xff]
      %v146 = vld [vmem:[%s111 + $0xe8] sm:$0xff]
      %v147 = vld [vmem:[%s111 + $0xf0] sm:$0xff]
      %v148 = vld [vmem:[%s111 + $0xf8] sm:$0xff]
      %v149 = vmul.f32 %v117, 0.12390899
      %v150 = vmul.f32 %v118, 0.12390899
      %v151 = vmul.f32 %v119, 0.12390899
      %v152 = vmul.f32 %v120, 0.12390899
      %v153 = vmul.f32 %v121, 0.12390899
      %v154 = vmul.f32 %v122, 0.12390899
      %v155 = vmul.f32 %v123, 0.12390899
      %v156 = vmul.f32 %v124, 0.12390899
      %v157 = vmul.f32 %v125, 0.12390899
      %v158 = vmul.f32 %v126, 0.12390899
      %v159 = vmul.f32 %v127, 0.12390899
      %v160 = vmul.f32 %v128, 0.12390899
      %v161 = vmul.f32 %v129, 0.12390899
      %v162 = vmul.f32 %v130, 0.12390899
      %v163 = vmul.f32 %v131, 0.12390899
      %v164 = vmul.f32 %v132, 0.12390899
      %v165 = vmul.f32 %v133, 0.12390899
      %v166 = vmul.f32 %v134, 0.12390899
      %v167 = vmul.f32 %v135, 0.12390899
      %v168 = vmul.f32 %v136, 0.12390899
      %v169 = vmul.f32 %v137, 0.12390899
      %v170 = vmul.f32 %v138, 0.12390899
      %v171 = vmul.f32 %v139, 0.12390899
      %v172 = vmul.f32 %v140, 0.12390899
      %v173 = vmul.f32 %v141, 0.12390899
      %v174 = vmul.f32 %v142, 0.12390899
      %v175 = vmul.f32 %v117, 0.1248418
      %v176 = vmul.f32 %v118, 0.1248418
      %v177 = vmul.f32 %v119, 0.1248418
      %v178 = vmul.f32 %v120, 0.1248418
      %v179 = vmul.f32 %v121, 0.1248418
      %v180 = vmul.f32 %v122, 0.1248418
      %v181 = vmul.f32 %v123, 0.1248418
      %v182 = vmul.f32 %v124, 0.1248418
      %v183 = vmul.f32 %v125, 0.1248418
      %v184 = vmul.f32 %v126, 0.1248418
      %v185 = vmul.f32 %v127, 0.1248418
      %v186 = vmul.f32 %v128, 0.1248418
      %v187 = vmul.f32 %v129, 0.1248418
      %v188 = vmul.f32 %v130, 0.1248418
      %v189 = vmul.f32 %v131, 0.1248418
      %v190 = vmul.f32 %v132, 0.1248418
      %v191 = vmul.f32 %v133, 0.1248418
      %v192 = vmul.f32 %v134, 0.1248418
      %v193 = vmul.f32 %v135, 0.1248418
      %v194 = vmul.f32 %v136, 0.1248418
      %v195 = vmul.f32 %v137, 0.1248418
      %v196 = vmul.f32 %v138, 0.1248418
      %v197 = vmul.f32 %v139, 0.1248418
      %v198 = vmul.f32 %v140, 0.1248418
      %v199 = vmul.f32 %v141, 0.1248418
      %v200 = vmul.f32 %v142, 0.1248418
      %v201 = vmul.f32 %v143, 0.1248418
      %v202 = vmul.f32 %v144, 0.1248418
      %v203 = vadd.f32 %v149, %v175
      %v204 = vadd.f32 %v150, %v176
      %v205 = vadd.f32 %v149, %v177
      %v206 = vadd.f32 %v150, %v178
      %v207 = vadd.f32 %v151, %v179
      %v208 = vadd.f32 %v152, %v180
      %v209 = vadd.f32 %v153, %v181
      %v210 = vadd.f32 %v154, %v182
      %v211 = vadd.f32 %v155, %v183
      %v212 = vadd.f32 %v156, %v184
      %v213 = vadd.f32 %v157, %v185
      %v214 = vadd.f32 %v158, %v186
      %v215 = vadd.f32 %v159, %v187
      %v216 = vadd.f32 %v160, %v188
      %v217 = vadd.f32 %v161, %v189
      %v218 = vadd.f32 %v162, %v190
      %v219 = vadd.f32 %v163, %v191
      %v220 = vadd.f32 %v164, %v192
      %v221 = vadd.f32 %v165, %v193
      %v222 = vadd.f32 %v166, %v194
      %v223 = vadd.f32 %v167, %v195
      %v224 = vadd.f32 %v168, %v196
      %v225 = vadd.f32 %v169, %v197
      %v226 = vadd.f32 %v170, %v198
      %v227 = vadd.f32 %v171, %v199
      %v228 = vadd.f32 %v172, %v200
      %v229 = vadd.f32 %v173, %v201
      %v230 = vadd.f32 %v174, %v202
      %v231 = vmul.f32 %v117, 0.12546757
      %v232 = vmul.f32 %v118, 0.12546757
      %v233 = vmul.f32 %v119, 0.12546757
      %v234 = vmul.f32 %v120, 0.12546757
      %v235 = vmul.f32 %v121, 0.12546757
      %v236 = vmul.f32 %v122, 0.12546757
      %v237 = vmul.f32 %v123, 0.12546757
      %v238 = vmul.f32 %v124, 0.12546757
      %v239 = vmul.f32 %v125, 0.12546757
      %v240 = vmul.f32 %v126, 0.12546757
      %v241 = vmul.f32 %v127, 0.12546757
      %v242 = vmul.f32 %v128, 0.12546757
      %v243 = vmul.f32 %v129, 0.12546757
      %v244 = vmul.f32 %v130, 0.12546757
      %v245 = vmul.f32 %v131, 0.12546757
      %v246 = vmul.f32 %v132, 0.12546757
      %v247 = vmul.f32 %v133, 0.12546757
      %v248 = vmul.f32 %v134, 0.12546757
      %v249 = vmul.f32 %v135, 0.12546757
      %v250 = vmul.f32 %v136, 0.12546757
      %v251 = vmul.f32 %v137, 0.12546757
      %v252 = vmul.f32 %v138, 0.12546757
      %v253 = vmul.f32 %v139, 0.12546757
      %v254 = vmul.f32 %v140, 0.12546757
      %v255 = vmul.f32 %v141, 0.12546757
      %v256 = vmul.f32 %v142, 0.12546757
      %v257 = vmul.f32 %v143, 0.12546757
      %v258 = vmul.f32 %v144, 0.12546757
      %v259 = vmul.f32 %v145, 0.12546757
      %v260 = vmul.f32 %v146, 0.12546757
      %v261 = vadd.f32 %v203, %v231
      %v262 = vadd.f32 %v204, %v232
      %v263 = vadd.f32 %v203, %v233
      %v264 = vadd.f32 %v204, %v234
      %v265 = vadd.f32 %v205, %v235
      %v266 = vadd.f32 %v206, %v236
      %v267 = vadd.f32 %v207, %v237
      %v268 = vadd.f32 %v208, %v238
      %v269 = vadd.f32 %v209, %v239
      %v270 = vadd.f32 %v210, %v240
      %v271 = vadd.f32 %v211, %v241
      %v272 = vadd.f32 %v212, %v242
      %v273 = vadd.f32 %v213, %v243
      %v274 = vadd.f32 %v214, %v244
      %v275 = vadd.f32 %v215, %v245
      %v276 = vadd.f32 %v216, %v246
      %v277 = vadd.f32 %v217, %v247
      %v278 = vadd.f32 %v218, %v248
      %v279 = vadd.f32 %v219, %v249
      %v280 = vadd.f32 %v220, %v250
      %v281 = vadd.f32 %v221, %v251
      %v282 = vadd.f32 %v222, %v252
      %v283 = vadd.f32 %v223, %v253
      %v284 = vadd.f32 %v224, %v254
      %v285 = vadd.f32 %v225, %v255
      %v286 = vadd.f32 %v226, %v256
      %v287 = vadd.f32 %v227, %v257
      %v288 = vadd.f32 %v228, %v258
      %v289 = vadd.f32 %v229, %v259
      %v290 = vadd.f32 %v230, %v260
      %v291 = vmul.f32 %v117, 0.12578164
      %v292 = vmul.f32 %v118, 0.12578164
      %v293 = vmul.f32 %v119, 0.12578164
      %v294 = vmul.f32 %v120, 0.12578164
      %v295 = vmul.f32 %v121, 0.12578164
      %v296 = vmul.f32 %v122, 0.12578164
      %v297 = vmul.f32 %v123, 0.12578164
      %v298 = vmul.f32 %v124, 0.12578164
      %v299 = vmul.f32 %v125, 0.12578164
      %v300 = vmul.f32 %v126, 0.12578164
      %v301 = vmul.f32 %v127, 0.12578164
      %v302 = vmul.f32 %v128, 0.12578164
      %v303 = vmul.f32 %v129, 0.12578164
      %v304 = vmul.f32 %v130, 0.12578164
      %v305 = vmul.f32 %v131, 0.12578164
      %v306 = vmul.f32 %v132, 0.12578164
      %v307 = vmul.f32 %v133, 0.12578164
      %v308 = vmul.f32 %v134, 0.12578164
      %v309 = vmul.f32 %v135, 0.12578164
      %v310 = vmul.f32 %v136, 0.12578164
      %v311 = vmul.f32 %v137, 0.12578164
      %v312 = vmul.f32 %v138, 0.12578164
      %v313 = vmul.f32 %v139, 0.12578164
      %v314 = vmul.f32 %v140, 0.12578164
      %v315 = vmul.f32 %v141, 0.12578164
      %v316 = vmul.f32 %v142, 0.12578164
      %v317 = vmul.f32 %v143, 0.12578164
      %v318 = vmul.f32 %v144, 0.12578164
      %v319 = vmul.f32 %v145, 0.12578164
      %v320 = vmul.f32 %v146, 0.12578164
      %v321 = vmul.f32 %v147, 0.12578164
      %v322 = vmul.f32 %v148, 0.12578164
      %v323 = vadd.f32 %v261, %v291
      %v324 = vadd.f32 %v262, %v292
      %v325 = vadd.f32 %v261, %v293
      %v326 = vadd.f32 %v262, %v294
      %v327 = vadd.f32 %v263, %v295
      %v328 = vadd.f32 %v264, %v296
      %v329 = vadd.f32 %v265, %v297
      %v330 = vadd.f32 %v266, %v298
      %v331 = vadd.f32 %v267, %v299
      %v332 = vadd.f32 %v268, %v300
      %v333 = vadd.f32 %v269, %v301
      %v334 = vadd.f32 %v270, %v302
      %v335 = vadd.f32 %v271, %v303
      %v336 = vadd.f32 %v272, %v304
      %v337 = vadd.f32 %v273, %v305
      %v338 = vadd.f32 %v274, %v306
      %v339 = vadd.f32 %v275, %v307
      %v340 = vadd.f32 %v276, %v308
      %v341 = vadd.f32 %v277, %v309
      %v342 = vadd.f32 %v278, %v310
      %v343 = vadd.f32 %v279, %v311
      %v344 = vadd.f32 %v280, %v312
      %v345 = vadd.f32 %v281, %v313
      %v346 = vadd.f32 %v282, %v314
      %v347 = vadd.f32 %v283, %v315
      %v348 = vadd.f32 %v284, %v316
      %v349 = vadd.f32 %v285, %v317
      %v350 = vadd.f32 %v286, %v318
      %v351 = vadd.f32 %v287, %v319
      %v352 = vadd.f32 %v288, %v320
      %v353 = vadd.f32 %v289, %v321
      %v354 = vadd.f32 %v290, %v322
      %v355 = vadd.f32 %v323, %v291
      %v356 = vadd.f32 %v324, %v292
      %v357 = vadd.f32 %v323, %v293
      %v358 = vadd.f32 %v324, %v294
      %v359 = vadd.f32 %v325, %v295
      %v360 = vadd.f32 %v326, %v296
      %v361 = vadd.f32 %v327, %v297
      %v362 = vadd.f32 %v328, %v298
      %v363 = vadd.f32 %v329, %v299
      %v364 = vadd.f32 %v330, %v300
      %v365 = vadd.f32 %v331, %v301
      %v366 = vadd.f32 %v332, %v302
      %v367 = vadd.f32 %v333, %v303
      %v368 = vadd.f32 %v334, %v304
      %v369 = vadd.f32 %v335, %v305
      %v370 = vadd.f32 %v336, %v306
      %v371 = vadd.f32 %v337, %v307
      %v372 = vadd.f32 %v338, %v308
      %v373 = vadd.f32 %v339, %v309
      %v374 = vadd.f32 %v340, %v310
      %v375 = vadd.f32 %v341, %v311
      %v376 = vadd.f32 %v342, %v312
      %v377 = vadd.f32 %v343, %v313
      %v378 = vadd.f32 %v344, %v314
      %v379 = vadd.f32 %v345, %v315
      %v380 = vadd.f32 %v346, %v316
      %v381 = vadd.f32 %v347, %v317
      %v382 = vadd.f32 %v348, %v318
      %v383 = vadd.f32 %v349, %v319
      %v384 = vadd.f32 %v350, %v320
      %v385 = vadd.f32 %v351, %v321
      %v386 = vadd.f32 %v352, %v322
      %v387 = vadd.f32 %v353, %v321
      %v388 = vadd.f32 %v354, %v322
      %v389 = vmul.f32 %v147, 0.12546757
      %v390 = vmul.f32 %v148, 0.12546757
      %v391 = vadd.f32 %v355, %v233
      %v392 = vadd.f32 %v356, %v234
      %v393 = vadd.f32 %v357, %v235
      %v394 = vadd.f32 %v358, %v236
      %v395 = vadd.f32 %v359, %v237
      %v396 = vadd.f32 %v360, %v238
      %v397 = vadd.f32 %v361, %v239
      %v398 = vadd.f32 %v362, %v240
      %v399 = vadd.f32 %v363, %v241
      %v400 = vadd.f32 %v364, %v242
      %v401 = vadd.f32 %v365, %v243
      %v402 = vadd.f32 %v366, %v244
      %v403 = vadd.f32 %v367, %v245
      %v404 = vadd.f32 %v368, %v246
      %v405 = vadd.f32 %v369, %v247
      %v406 = vadd.f32 %v370, %v248
      %v407 = vadd.f32 %v371, %v249
      %v408 = vadd.f32 %v372, %v250
      %v409 = vadd.f32 %v373, %v251
      %v410 = vadd.f32 %v374, %v252
      %v411 = vadd.f32 %v375, %v253
      %v412 = vadd.f32 %v376, %v254
      %v413 = vadd.f32 %v377, %v255
      %v414 = vadd.f32 %v378, %v256
      %v415 = vadd.f32 %v379, %v257
      %v416 = vadd.f32 %v380, %v258
      %v417 = vadd.f32 %v381, %v259
      %v418 = vadd.f32 %v382, %v260
      %v419 = vadd.f32 %v383, %v389
      %v420 = vadd.f32 %v384, %v390
      %v421 = vadd.f32 %v385, %v389
      %v422 = vadd.f32 %v386, %v390
      %v423 = vadd.f32 %v387, %v389
      %v424 = vadd.f32 %v388, %v390
      %v425 = vmul.f32 %v145, 0.1248418
      %v426 = vmul.f32 %v146, 0.1248418
      %v427 = vmul.f32 %v147, 0.1248418
      %v428 = vmul.f32 %v148, 0.1248418
      %v429 = vadd.f32 %v391, %v179
      %v430 = vadd.f32 %v392, %v180
      %v431 = vadd.f32 %v393, %v181
      %v432 = vadd.f32 %v394, %v182
      %v433 = vadd.f32 %v395, %v183
      %v434 = vadd.f32 %v396, %v184
      %v435 = vadd.f32 %v397, %v185
      %v436 = vadd.f32 %v398, %v186
      %v437 = vadd.f32 %v399, %v187
      %v438 = vadd.f32 %v400, %v188
      %v439 = vadd.f32 %v401, %v189
      %v440 = vadd.f32 %v402, %v190
      %v441 = vadd.f32 %v403, %v191
      %v442 = vadd.f32 %v404, %v192
      %v443 = vadd.f32 %v405, %v193
      %v444 = vadd.f32 %v406, %v194
      %v445 = vadd.f32 %v407, %v195
      %v446 = vadd.f32 %v408, %v196
      %v447 = vadd.f32 %v409, %v197
      %v448 = vadd.f32 %v410, %v198
      %v449 = vadd.f32 %v411, %v199
      %v450 = vadd.f32 %v412, %v200
      %v451 = vadd.f32 %v413, %v201
      %v452 = vadd.f32 %v414, %v202
      %v453 = vadd.f32 %v415, %v425
      %v454 = vadd.f32 %v416, %v426
      %v455 = vadd.f32 %v417, %v427
      %v456 = vadd.f32 %v418, %v428
      %v457 = vadd.f32 %v419, %v427
      %v458 = vadd.f32 %v420, %v428
      %v459 = vadd.f32 %v421, %v427
      %v460 = vadd.f32 %v422, %v428
      %v461 = vadd.f32 %v423, %v427
      %v462 = vadd.f32 %v424, %v428
      %v463 = vmul.f32 %v143, 0.12390899
      %v464 = vmul.f32 %v144, 0.12390899
      %v465 = vmul.f32 %v145, 0.12390899
      %v466 = vmul.f32 %v146, 0.12390899
      %v467 = vmul.f32 %v147, 0.12390899
      %v468 = vmul.f32 %v148, 0.12390899
      %v469 = vadd.f32 %v429, %v155
      %v470 = vadd.f32 %v430, %v156
      %v471 = vadd.f32 %v431, %v157
      %v472 = vadd.f32 %v432, %v158
      %v473 = vadd.f32 %v433, %v159
      %v474 = vadd.f32 %v434, %v160
      %v475 = vadd.f32 %v435, %v161
      %v476 = vadd.f32 %v436, %v162
      %v477 = vadd.f32 %v437, %v163
      %v478 = vadd.f32 %v438, %v164
      %v479 = vadd.f32 %v439, %v165
      %v480 = vadd.f32 %v440, %v166
      %v481 = vadd.f32 %v441, %v167
      %v482 = vadd.f32 %v442, %v168
      %v483 = vadd.f32 %v443, %v169
      %v484 = vadd.f32 %v444, %v170
      %v485 = vadd.f32 %v445, %v171
      %v486 = vadd.f32 %v446, %v172
      %v487 = vadd.f32 %v447, %v173
      %v488 = vadd.f32 %v448, %v174
      %v489 = vadd.f32 %v449, %v463
      %v490 = vadd.f32 %v450, %v464
      %v491 = vadd.f32 %v451, %v465
      %v492 = vadd.f32 %v452, %v466
      %v493 = vadd.f32 %v453, %v467
      %v494 = vadd.f32 %v454, %v468
      %v495 = vadd.f32 %v455, %v467
      %v496 = vadd.f32 %v456, %v468
      %v497 = vadd.f32 %v457, %v467
      %v498 = vadd.f32 %v458, %v468
      %v499 = vadd.f32 %v459, %v467
      %v500 = vadd.f32 %v460, %v468
      %v501 = vadd.f32 %v461, %v467
      %v502 = vadd.f32 %v462, %v468
      %v503 = vlaneseq
      %v504 = vshrl.u32 %v503, 7
      %v505 = vsub.s32 0, %v504
      %v506 = vrot.slane %v469, %v505
      %v507 = vlaneseq
      %v508 = vshrl.u32 %v507, 7
      %v509 = vsub.s32 0, %v508
      %v510 = vrot.slane %v471, %v509
      %v511 = vlaneseq
      %v512 = vshrl.u32 %v511, 7
      %v513 = vsub.s32 0, %v512
      %v514 = vrot.slane %v473, %v513
      %v515 = vlaneseq
      %v516 = vshrl.u32 %v515, 7
      %v517 = vsub.s32 0, %v516
      %v518 = vrot.slane %v475, %v517
      %v519 = vlaneseq
      %v520 = vshrl.u32 %v519, 7
      %v521 = vsub.s32 0, %v520
      %v522 = vrot.slane %v477, %v521
      %v523 = vlaneseq
      %v524 = vshrl.u32 %v523, 7
      %v525 = vsub.s32 0, %v524
      %v526 = vrot.slane %v479, %v525
      %v527 = vlaneseq
      %v528 = vshrl.u32 %v527, 7
      %v529 = vsub.s32 0, %v528
      %v530 = vrot.slane %v481, %v529
      %v531 = vlaneseq
      %v532 = vshrl.u32 %v531, 7
      %v533 = vsub.s32 0, %v532
      %v534 = vrot.slane %v483, %v533
      %v535 = vlaneseq
      %v536 = vshrl.u32 %v535, 7
      %v537 = vsub.s32 0, %v536
      %v538 = vrot.slane %v485, %v537
      %v539 = vlaneseq
      %v540 = vshrl.u32 %v539, 7
      %v541 = vsub.s32 0, %v540
      %v542 = vrot.slane %v487, %v541
      %v543 = vlaneseq
      %v544 = vshrl.u32 %v543, 7
      %v545 = vsub.s32 0, %v544
      %v546 = vrot.slane %v489, %v545
      %v547 = vlaneseq
      %v548 = vshrl.u32 %v547, 7
      %v549 = vsub.s32 0, %v548
      %v550 = vrot.slane %v491, %v549
      %v551 = vlaneseq
      %v552 = vshrl.u32 %v551, 7
      %v553 = vsub.s32 0, %v552
      %v554 = vrot.slane %v493, %v553
      %v555 = vlaneseq
      %v556 = vshrl.u32 %v555, 7
      %v557 = vsub.s32 0, %v556
      %v558 = vrot.slane %v495, %v557
      %v559 = vlaneseq
      %v560 = vshrl.u32 %v559, 7
      %v561 = vsub.s32 0, %v560
      %v562 = vrot.slane %v497, %v561
      %v563 = vlaneseq
      %v564 = vshrl.u32 %v563, 7
      %v565 = vsub.s32 0, %v564
      %v566 = vrot.slane %v499, %v565
      %v567 = vlaneseq
      %v568 = vshrl.u32 %v567, 7
      %v569 = vsub.s32 0, %v568
      %v570 = vrot.slane %v501, %v569
      %v571 = vlaneseq
      %v572 = vshrl.u32 %v571, 7
      %v573 = vsub.s32 7, %v572
      %v574 = vrot.slane %v470, %v573
      %v575 = vlaneseq
      %v576 = vshrl.u32 %v575, 7
      %v577 = vsub.s32 7, %v576
      %v578 = vrot.slane %v472, %v577
      %v579 = vlaneseq
      %v580 = vshrl.u32 %v579, 7
      %v581 = vsub.s32 7, %v580
      %v582 = vrot.slane %v474, %v581
      %v583 = vlaneseq
      %v584 = vshrl.u32 %v583, 7
      %v585 = vsub.s32 7, %v584
      %v586 = vrot.slane %v476, %v585
      %v587 = vlaneseq
      %v588 = vshrl.u32 %v587, 7
      %v589 = vsub.s32 7, %v588
      %v590 = vrot.slane %v478, %v589
      %v591 = vlaneseq
      %v592 = vshrl.u32 %v591, 7
      %v593 = vsub.s32 7, %v592
      %v594 = vrot.slane %v480, %v593
      %v595 = vlaneseq
      %v596 = vshrl.u32 %v595, 7
      %v597 = vsub.s32 7, %v596
      %v598 = vrot.slane %v482, %v597
      %v599 = vlaneseq
      %v600 = vshrl.u32 %v599, 7
      %v601 = vsub.s32 7, %v600
      %v602 = vrot.slane %v484, %v601
      %v603 = vlaneseq
      %v604 = vshrl.u32 %v603, 7
      %v605 = vsub.s32 7, %v604
      %v606 = vrot.slane %v486, %v605
      %v607 = vlaneseq
      %v608 = vshrl.u32 %v607, 7
      %v609 = vsub.s32 7, %v608
      %v610 = vrot.slane %v488, %v609
      %v611 = vlaneseq
      %v612 = vshrl.u32 %v611, 7
      %v613 = vsub.s32 7, %v612
      %v614 = vrot.slane %v490, %v613
      %v615 = vlaneseq
      %v616 = vshrl.u32 %v615, 7
      %v617 = vsub.s32 7, %v616
      %v618 = vrot.slane %v492, %v617
      %v619 = vlaneseq
      %v620 = vshrl.u32 %v619, 7
      %v621 = vsub.s32 7, %v620
      %v622 = vrot.slane %v494, %v621
      %v623 = vlaneseq
      %v624 = vshrl.u32 %v623, 7
      %v625 = vsub.s32 7, %v624
      %v626 = vrot.slane %v496, %v625
      %v627 = vlaneseq
      %v628 = vshrl.u32 %v627, 7
      %v629 = vsub.s32 7, %v628
      %v630 = vrot.slane %v498, %v629
      %v631 = vlaneseq
      %v632 = vshrl.u32 %v631, 7
      %v633 = vsub.s32 7, %v632
      %v634 = vrot.slane %v500, %v633
      %v635 = vlaneseq
      %v636 = vshrl.u32 %v635, 7
      %v637 = vsub.s32 7, %v636
      %v638 = vrot.slane %v502, %v637
      %vm673 = vcmask 1043456
      %v674 = vrot.slane %v469, 4
      %v675 = vrot.slane %v470, 4
      %v676 = vsel %vm673, %v674, %v675
      %v677 = vrot.slane %v471, 4
      %v678 = vrot.slane %v472, 4
      %v679 = vsel %vm673, %v677, %v678
      %v680 = vrot.slane %v473, 4
      %v681 = vrot.slane %v474, 4
      %v682 = vsel %vm673, %v680, %v681
      %v683 = vrot.slane %v475, 4
      %v684 = vrot.slane %v476, 4
      %v685 = vsel %vm673, %v683, %v684
      %v686 = vrot.slane %v477, 4
      %v687 = vrot.slane %v478, 4
      %v688 = vsel %vm673, %v686, %v687
      %v689 = vrot.slane %v479, 4
      %v690 = vrot.slane %v480, 4
      %v691 = vsel %vm673, %v689, %v690
      %v692 = vrot.slane %v481, 4
      %v693 = vrot.slane %v482, 4
      %v694 = vsel %vm673, %v692, %v693
      %v695 = vrot.slane %v483, 4
      %v696 = vrot.slane %v484, 4
      %v697 = vsel %vm673, %v695, %v696
      %v698 = vrot.slane %v485, 4
      %v699 = vrot.slane %v486, 4
      %v700 = vsel %vm673, %v698, %v699
      %v701 = vrot.slane %v487, 4
      %v702 = vrot.slane %v488, 4
      %v703 = vsel %vm673, %v701, %v702
      %v704 = vrot.slane %v489, 4
      %v705 = vrot.slane %v490, 4
      %v706 = vsel %vm673, %v704, %v705
      %v707 = vrot.slane %v491, 4
      %v708 = vrot.slane %v492, 4
      %v709 = vsel %vm673, %v707, %v708
      %v710 = vrot.slane %v493, 4
      %v711 = vrot.slane %v494, 4
      %v712 = vsel %vm673, %v710, %v711
      %v713 = vrot.slane %v495, 4
      %v714 = vrot.slane %v496, 4
      %v715 = vsel %vm673, %v713, %v714
      %v716 = vrot.slane %v497, 4
      %v717 = vrot.slane %v498, 4
      %v718 = vsel %vm673, %v716, %v717
      %v719 = vrot.slane %v499, 4
      %v720 = vrot.slane %v500, 4
      %v721 = vsel %vm673, %v719, %v720
      %v722 = vrot.slane %v501, 4
      %v723 = vrot.slane %v502, 4
      %v724 = vsel %vm673, %v722, %v723
      %v776 = vsel %vm673, %v506, %v674
      %v777 = vsel %vm673, %v510, %v677
      %v778 = vsel %vm673, %v514, %v680
      %v779 = vsel %vm673, %v518, %v683
      %v780 = vsel %vm673, %v522, %v686
      %v781 = vsel %vm673, %v526, %v689
      %v782 = vsel %vm673, %v530, %v692
      %v783 = vsel %vm673, %v534, %v695
      %v784 = vsel %vm673, %v538, %v698
      %v785 = vsel %vm673, %v542, %v701
      %v786 = vsel %vm673, %v546, %v704
      %v787 = vsel %vm673, %v550, %v707
      %v788 = vsel %vm673, %v554, %v710
      %v789 = vsel %vm673, %v558, %v713
      %v790 = vsel %vm673, %v562, %v716
      %v791 = vsel %vm673, %v566, %v719
      %v792 = vsel %vm673, %v570, %v722
      %v793 = vsel %vm673, %v675, %v574
      %v794 = vsel %vm673, %v678, %v578
      %v795 = vsel %vm673, %v681, %v582
      %v796 = vsel %vm673, %v684, %v586
      %v797 = vsel %vm673, %v687, %v590
      %v798 = vsel %vm673, %v690, %v594
      %v799 = vsel %vm673, %v693, %v598
      %v800 = vsel %vm673, %v696, %v602
      %v801 = vsel %vm673, %v699, %v606
      %v802 = vsel %vm673, %v702, %v610
      %v803 = vsel %vm673, %v705, %v614
      %v804 = vsel %vm673, %v708, %v618
      %v805 = vsel %vm673, %v711, %v622
      %v806 = vsel %vm673, %v714, %v626
      %v807 = vsel %vm673, %v717, %v630
      %v808 = vsel %vm673, %v720, %v634
      %v809 = vsel %vm673, %v723, %v638
      %v810 = vmul.f32 %v776, 0.12390899
      %v811 = vmul.f32 %v676, 0.12390899
      %v812 = vmul.f32 %v793, 0.12390899
      %v813 = vmul.f32 %v777, 0.12390899
      %v814 = vmul.f32 %v679, 0.12390899
      %v815 = vmul.f32 %v794, 0.12390899
      %v816 = vmul.f32 %v778, 0.12390899
      %v817 = vmul.f32 %v682, 0.12390899
      %v818 = vmul.f32 %v795, 0.12390899
      %v819 = vmul.f32 %v779, 0.12390899
      %v820 = vmul.f32 %v685, 0.12390899
      %v821 = vmul.f32 %v796, 0.12390899
      %v822 = vmul.f32 %v780, 0.12390899
      %v823 = vmul.f32 %v688, 0.12390899
      %v824 = vmul.f32 %v797, 0.12390899
      %v825 = vmul.f32 %v781, 0.12390899
      %v826 = vmul.f32 %v691, 0.12390899
      %v827 = vmul.f32 %v798, 0.12390899
      %v828 = vmul.f32 %v782, 0.12390899
      %v829 = vmul.f32 %v694, 0.12390899
      %v830 = vmul.f32 %v799, 0.12390899
      %v831 = vmul.f32 %v783, 0.12390899
      %v832 = vmul.f32 %v697, 0.12390899
      %v833 = vmul.f32 %v800, 0.12390899
      %v834 = vmul.f32 %v784, 0.12390899
      %v835 = vmul.f32 %v700, 0.12390899
      %v836 = vmul.f32 %v801, 0.12390899
      %v837 = vmul.f32 %v785, 0.12390899
      %v838 = vmul.f32 %v703, 0.12390899
      %v839 = vmul.f32 %v802, 0.12390899
      %v840 = vmul.f32 %v786, 0.12390899
      %v841 = vmul.f32 %v706, 0.12390899
      %v842 = vmul.f32 %v803, 0.12390899
      %v843 = vmul.f32 %v787, 0.12390899
      %v844 = vmul.f32 %v709, 0.12390899
      %v845 = vmul.f32 %v804, 0.12390899
      %v846 = vmul.f32 %v788, 0.12390899
      %v847 = vmul.f32 %v712, 0.12390899
      %v848 = vmul.f32 %v805, 0.12390899
      %v849 = vmul.f32 %v789, 0.12390899
      %v850 = vmul.f32 %v715, 0.12390899
      %v851 = vmul.f32 %v806, 0.12390899
      %v852 = vmul.f32 %v790, 0.12390899
      %v853 = vmul.f32 %v718, 0.12390899
      %v854 = vmul.f32 %v807, 0.12390899
      %v855 = vmul.f32 %v791, 0.12390899
      %v856 = vmul.f32 %v721, 0.12390899
      %v857 = vmul.f32 %v808, 0.12390899
      %v858 = vmul.f32 %v792, 0.12390899
      %v859 = vmul.f32 %v724, 0.12390899
      %v860 = vmul.f32 %v809, 0.12390899
      %v861 = vmul.f32 %v776, 0.1248418
      %v862 = vmul.f32 %v676, 0.1248418
      %v863 = vmul.f32 %v793, 0.1248418
      %v864 = vmul.f32 %v777, 0.1248418
      %v865 = vmul.f32 %v679, 0.1248418
      %v866 = vmul.f32 %v794, 0.1248418
      %v867 = vmul.f32 %v778, 0.1248418
      %v868 = vmul.f32 %v682, 0.1248418
      %v869 = vmul.f32 %v795, 0.1248418
      %v870 = vmul.f32 %v779, 0.1248418
      %v871 = vmul.f32 %v685, 0.1248418
      %v872 = vmul.f32 %v796, 0.1248418
      %v873 = vmul.f32 %v780, 0.1248418
      %v874 = vmul.f32 %v688, 0.1248418
      %v875 = vmul.f32 %v797, 0.1248418
      %v876 = vmul.f32 %v781, 0.1248418
      %v877 = vmul.f32 %v691, 0.1248418
      %v878 = vmul.f32 %v798, 0.1248418
      %v879 = vmul.f32 %v782, 0.1248418
      %v880 = vmul.f32 %v694, 0.1248418
      %v881 = vmul.f32 %v799, 0.1248418
      %v882 = vmul.f32 %v783, 0.1248418
      %v883 = vmul.f32 %v697, 0.1248418
      %v884 = vmul.f32 %v800, 0.1248418
      %v885 = vmul.f32 %v784, 0.1248418
      %v886 = vmul.f32 %v700, 0.1248418
      %v887 = vmul.f32 %v801, 0.1248418
      %v888 = vmul.f32 %v785, 0.1248418
      %v889 = vmul.f32 %v703, 0.1248418
      %v890 = vmul.f32 %v802, 0.1248418
      %v891 = vmul.f32 %v786, 0.1248418
      %v892 = vmul.f32 %v706, 0.1248418
      %v893 = vmul.f32 %v803, 0.1248418
      %v894 = vmul.f32 %v787, 0.1248418
      %v895 = vmul.f32 %v709, 0.1248418
      %v896 = vmul.f32 %v804, 0.1248418
      %v897 = vmul.f32 %v788, 0.1248418
      %v898 = vmul.f32 %v712, 0.1248418
      %v899 = vmul.f32 %v805, 0.1248418
      %v900 = vmul.f32 %v789, 0.1248418
      %v901 = vmul.f32 %v715, 0.1248418
      %v902 = vmul.f32 %v806, 0.1248418
      %v903 = vmul.f32 %v790, 0.1248418
      %v904 = vmul.f32 %v718, 0.1248418
      %v905 = vmul.f32 %v807, 0.1248418
      %v906 = vmul.f32 %v791, 0.1248418
      %v907 = vmul.f32 %v721, 0.1248418
      %v908 = vmul.f32 %v808, 0.1248418
      %v909 = vmul.f32 %v792, 0.1248418
      %v910 = vmul.f32 %v724, 0.1248418
      %v911 = vmul.f32 %v809, 0.1248418
      %vm963 = vcmask 1046528
      %v964 = vrot.slane %v861, 1
      %v965 = vrot.slane %v862, 1
      %v966 = vsel %vm963, %v964, %v965
      %v967 = vrot.slane %v863, 1
      %v968 = vsel %vm963, %v965, %v967
      %v969 = vrot.slane %v864, 1
      %v970 = vrot.slane %v865, 1
      %v971 = vsel %vm963, %v969, %v970
      %v972 = vrot.slane %v866, 1
      %v973 = vsel %vm963, %v970, %v972
      %v974 = vrot.slane %v867, 1
      %v975 = vrot.slane %v868, 1
      %v976 = vsel %vm963, %v974, %v975
      %v977 = vrot.slane %v869, 1
      %v978 = vsel %vm963, %v975, %v977
      %v979 = vrot.slane %v870, 1
      %v980 = vrot.slane %v871, 1
      %v981 = vsel %vm963, %v979, %v980
      %v982 = vrot.slane %v872, 1
      %v983 = vsel %vm963, %v980, %v982
      %v984 = vrot.slane %v873, 1
      %v985 = vrot.slane %v874, 1
      %v986 = vsel %vm963, %v984, %v985
      %v987 = vrot.slane %v875, 1
      %v988 = vsel %vm963, %v985, %v987
      %v989 = vrot.slane %v876, 1
      %v990 = vrot.slane %v877, 1
      %v991 = vsel %vm963, %v989, %v990
      %v992 = vrot.slane %v878, 1
      %v993 = vsel %vm963, %v990, %v992
      %v994 = vrot.slane %v879, 1
      %v995 = vrot.slane %v880, 1
      %v996 = vsel %vm963, %v994, %v995
      %v997 = vrot.slane %v881, 1
      %v998 = vsel %vm963, %v995, %v997
      %v999 = vrot.slane %v882, 1
      %v1000 = vrot.slane %v883, 1
      %v1001 = vsel %vm963, %v999, %v1000
      %v1002 = vrot.slane %v884, 1
      %v1003 = vsel %vm963, %v1000, %v1002
      %v1004 = vrot.slane %v885, 1
      %v1005 = vrot.slane %v886, 1
      %v1006 = vsel %vm963, %v1004, %v1005
      %v1007 = vrot.slane %v887, 1
      %v1008 = vsel %vm963, %v1005, %v1007
      %v1009 = vrot.slane %v888, 1
      %v1010 = vrot.slane %v889, 1
      %v1011 = vsel %vm963, %v1009, %v1010
      %v1012 = vrot.slane %v890, 1
      %v1013 = vsel %vm963, %v1010, %v1012
      %v1014 = vrot.slane %v891, 1
      %v1015 = vrot.slane %v892, 1
      %v1016 = vsel %vm963, %v1014, %v1015
      %v1017 = vrot.slane %v893, 1
      %v1018 = vsel %vm963, %v1015, %v1017
      %v1019 = vrot.slane %v894, 1
      %v1020 = vrot.slane %v895, 1
      %v1021 = vsel %vm963, %v1019, %v1020
      %v1022 = vrot.slane %v896, 1
      %v1023 = vsel %vm963, %v1020, %v1022
      %v1024 = vrot.slane %v897, 1
      %v1025 = vrot.slane %v898, 1
      %v1026 = vsel %vm963, %v1024, %v1025
      %v1027 = vrot.slane %v899, 1
      %v1028 = vsel %vm963, %v1025, %v1027
      %v1029 = vrot.slane %v900, 1
      %v1030 = vrot.slane %v901, 1
      %v1031 = vsel %vm963, %v1029, %v1030
      %v1032 = vrot.slane %v902, 1
      %v1033 = vsel %vm963, %v1030, %v1032
      %v1034 = vrot.slane %v903, 1
      %v1035 = vrot.slane %v904, 1
      %v1036 = vsel %vm963, %v1034, %v1035
      %v1037 = vrot.slane %v905, 1
      %v1038 = vsel %vm963, %v1035, %v1037
      %v1039 = vrot.slane %v906, 1
      %v1040 = vrot.slane %v907, 1
      %v1041 = vsel %vm963, %v1039, %v1040
      %v1042 = vrot.slane %v908, 1
      %v1043 = vsel %vm963, %v1040, %v1042
      %v1044 = vrot.slane %v909, 1
      %v1045 = vrot.slane %v910, 1
      %v1046 = vsel %vm963, %v1044, %v1045
      %v1047 = vrot.slane %v911, 1
      %v1048 = vsel %vm963, %v1045, %v1047
      %v1100 = vadd.f32 %v810, %v966
      %v1101 = vadd.f32 %v811, %v968
      %v1102 = vadd.f32 %v812, %v967
      %v1103 = vadd.f32 %v813, %v971
      %v1104 = vadd.f32 %v814, %v973
      %v1105 = vadd.f32 %v815, %v972
      %v1106 = vadd.f32 %v816, %v976
      %v1107 = vadd.f32 %v817, %v978
      %v1108 = vadd.f32 %v818, %v977
      %v1109 = vadd.f32 %v819, %v981
      %v1110 = vadd.f32 %v820, %v983
      %v1111 = vadd.f32 %v821, %v982
      %v1112 = vadd.f32 %v822, %v986
      %v1113 = vadd.f32 %v823, %v988
      %v1114 = vadd.f32 %v824, %v987
      %v1115 = vadd.f32 %v825, %v991
      %v1116 = vadd.f32 %v826, %v993
      %v1117 = vadd.f32 %v827, %v992
      %v1118 = vadd.f32 %v828, %v996
      %v1119 = vadd.f32 %v829, %v998
      %v1120 = vadd.f32 %v830, %v997
      %v1121 = vadd.f32 %v831, %v1001
      %v1122 = vadd.f32 %v832, %v1003
      %v1123 = vadd.f32 %v833, %v1002
      %v1124 = vadd.f32 %v834, %v1006
      %v1125 = vadd.f32 %v835, %v1008
      %v1126 = vadd.f32 %v836, %v1007
      %v1127 = vadd.f32 %v837, %v1011
      %v1128 = vadd.f32 %v838, %v1013
      %v1129 = vadd.f32 %v839, %v1012
      %v1130 = vadd.f32 %v840, %v1016
      %v1131 = vadd.f32 %v841, %v1018
      %v1132 = vadd.f32 %v842, %v1017
      %v1133 = vadd.f32 %v843, %v1021
      %v1134 = vadd.f32 %v844, %v1023
      %v1135 = vadd.f32 %v845, %v1022
      %v1136 = vadd.f32 %v846, %v1026
      %v1137 = vadd.f32 %v847, %v1028
      %v1138 = vadd.f32 %v848, %v1027
      %v1139 = vadd.f32 %v849, %v1031
      %v1140 = vadd.f32 %v850, %v1033
      %v1141 = vadd.f32 %v851, %v1032
      %v1142 = vadd.f32 %v852, %v1036
      %v1143 = vadd.f32 %v853, %v1038
      %v1144 = vadd.f32 %v854, %v1037
      %v1145 = vadd.f32 %v855, %v1041
      %v1146 = vadd.f32 %v856, %v1043
      %v1147 = vadd.f32 %v857, %v1042
      %v1148 = vadd.f32 %v858, %v1046
      %v1149 = vadd.f32 %v859, %v1048
      %v1150 = vadd.f32 %v860, %v1047
      %v1151 = vmul.f32 %v776, 0.12546757
      %v1152 = vmul.f32 %v676, 0.12546757
      %v1153 = vmul.f32 %v793, 0.12546757
      %v1154 = vmul.f32 %v777, 0.12546757
      %v1155 = vmul.f32 %v679, 0.12546757
      %v1156 = vmul.f32 %v794, 0.12546757
      %v1157 = vmul.f32 %v778, 0.12546757
      %v1158 = vmul.f32 %v682, 0.12546757
      %v1159 = vmul.f32 %v795, 0.12546757
      %v1160 = vmul.f32 %v779, 0.12546757
      %v1161 = vmul.f32 %v685, 0.12546757
      %v1162 = vmul.f32 %v796, 0.12546757
      %v1163 = vmul.f32 %v780, 0.12546757
      %v1164 = vmul.f32 %v688, 0.12546757
      %v1165 = vmul.f32 %v797, 0.12546757
      %v1166 = vmul.f32 %v781, 0.12546757
      %v1167 = vmul.f32 %v691, 0.12546757
      %v1168 = vmul.f32 %v798, 0.12546757
      %v1169 = vmul.f32 %v782, 0.12546757
      %v1170 = vmul.f32 %v694, 0.12546757
      %v1171 = vmul.f32 %v799, 0.12546757
      %v1172 = vmul.f32 %v783, 0.12546757
      %v1173 = vmul.f32 %v697, 0.12546757
      %v1174 = vmul.f32 %v800, 0.12546757
      %v1175 = vmul.f32 %v784, 0.12546757
      %v1176 = vmul.f32 %v700, 0.12546757
      %v1177 = vmul.f32 %v801, 0.12546757
      %v1178 = vmul.f32 %v785, 0.12546757
      %v1179 = vmul.f32 %v703, 0.12546757
      %v1180 = vmul.f32 %v802, 0.12546757
      %v1181 = vmul.f32 %v786, 0.12546757
      %v1182 = vmul.f32 %v706, 0.12546757
      %v1183 = vmul.f32 %v803, 0.12546757
      %v1184 = vmul.f32 %v787, 0.12546757
      %v1185 = vmul.f32 %v709, 0.12546757
      %v1186 = vmul.f32 %v804, 0.12546757
      %v1187 = vmul.f32 %v788, 0.12546757
      %v1188 = vmul.f32 %v712, 0.12546757
      %v1189 = vmul.f32 %v805, 0.12546757
      %v1190 = vmul.f32 %v789, 0.12546757
      %v1191 = vmul.f32 %v715, 0.12546757
      %v1192 = vmul.f32 %v806, 0.12546757
      %v1193 = vmul.f32 %v790, 0.12546757
      %v1194 = vmul.f32 %v718, 0.12546757
      %v1195 = vmul.f32 %v807, 0.12546757
      %v1196 = vmul.f32 %v791, 0.12546757
      %v1197 = vmul.f32 %v721, 0.12546757
      %v1198 = vmul.f32 %v808, 0.12546757
      %v1199 = vmul.f32 %v792, 0.12546757
      %v1200 = vmul.f32 %v724, 0.12546757
      %v1201 = vmul.f32 %v809, 0.12546757
      %vm1253 = vcmask 1045504
      %v1254 = vrot.slane %v1151, 2
      %v1255 = vrot.slane %v1152, 2
      %v1256 = vsel %vm1253, %v1254, %v1255
      %v1257 = vrot.slane %v1153, 2
      %v1258 = vsel %vm1253, %v1255, %v1257
      %v1259 = vrot.slane %v1154, 2
      %v1260 = vrot.slane %v1155, 2
      %v1261 = vsel %vm1253, %v1259, %v1260
      %v1262 = vrot.slane %v1156, 2
      %v1263 = vsel %vm1253, %v1260, %v1262
      %v1264 = vrot.slane %v1157, 2
      %v1265 = vrot.slane %v1158, 2
      %v1266 = vsel %vm1253, %v1264, %v1265
      %v1267 = vrot.slane %v1159, 2
      %v1268 = vsel %vm1253, %v1265, %v1267
      %v1269 = vrot.slane %v1160, 2
      %v1270 = vrot.slane %v1161, 2
      %v1271 = vsel %vm1253, %v1269, %v1270
      %v1272 = vrot.slane %v1162, 2
      %v1273 = vsel %vm1253, %v1270, %v1272
      %v1274 = vrot.slane %v1163, 2
      %v1275 = vrot.slane %v1164, 2
      %v1276 = vsel %vm1253, %v1274, %v1275
      %v1277 = vrot.slane %v1165, 2
      %v1278 = vsel %vm1253, %v1275, %v1277
      %v1279 = vrot.slane %v1166, 2
      %v1280 = vrot.slane %v1167, 2
      %v1281 = vsel %vm1253, %v1279, %v1280
      %v1282 = vrot.slane %v1168, 2
      %v1283 = vsel %vm1253, %v1280, %v1282
      %v1284 = vrot.slane %v1169, 2
      %v1285 = vrot.slane %v1170, 2
      %v1286 = vsel %vm1253, %v1284, %v1285
      %v1287 = vrot.slane %v1171, 2
      %v1288 = vsel %vm1253, %v1285, %v1287
      %v1289 = vrot.slane %v1172, 2
      %v1290 = vrot.slane %v1173, 2
      %v1291 = vsel %vm1253, %v1289, %v1290
      %v1292 = vrot.slane %v1174, 2
      %v1293 = vsel %vm1253, %v1290, %v1292
      %v1294 = vrot.slane %v1175, 2
      %v1295 = vrot.slane %v1176, 2
      %v1296 = vsel %vm1253, %v1294, %v1295
      %v1297 = vrot.slane %v1177, 2
      %v1298 = vsel %vm1253, %v1295, %v1297
      %v1299 = vrot.slane %v1178, 2
      %v1300 = vrot.slane %v1179, 2
      %v1301 = vsel %vm1253, %v1299, %v1300
      %v1302 = vrot.slane %v1180, 2
      %v1303 = vsel %vm1253, %v1300, %v1302
      %v1304 = vrot.slane %v1181, 2
      %v1305 = vrot.slane %v1182, 2
      %v1306 = vsel %vm1253, %v1304, %v1305
      %v1307 = vrot.slane %v1183, 2
      %v1308 = vsel %vm1253, %v1305, %v1307
      %v1309 = vrot.slane %v1184, 2
      %v1310 = vrot.slane %v1185, 2
      %v1311 = vsel %vm1253, %v1309, %v1310
      %v1312 = vrot.slane %v1186, 2
      %v1313 = vsel %vm1253, %v1310, %v1312
      %v1314 = vrot.slane %v1187, 2
      %v1315 = vrot.slane %v1188, 2
      %v1316 = vsel %vm1253, %v1314, %v1315
      %v1317 = vrot.slane %v1189, 2
      %v1318 = vsel %vm1253, %v1315, %v1317
      %v1319 = vrot.slane %v1190, 2
      %v1320 = vrot.slane %v1191, 2
      %v1321 = vsel %vm1253, %v1319, %v1320
      %v1322 = vrot.slane %v1192, 2
      %v1323 = vsel %vm1253, %v1320, %v1322
      %v1324 = vrot.slane %v1193, 2
      %v1325 = vrot.slane %v1194, 2
      %v1326 = vsel %vm1253, %v1324, %v1325
      %v1327 = vrot.slane %v1195, 2
      %v1328 = vsel %vm1253, %v1325, %v1327
      %v1329 = vrot.slane %v1196, 2
      %v1330 = vrot.slane %v1197, 2
      %v1331 = vsel %vm1253, %v1329, %v1330
      %v1332 = vrot.slane %v1198, 2
      %v1333 = vsel %vm1253, %v1330, %v1332
      %v1334 = vrot.slane %v1199, 2
      %v1335 = vrot.slane %v1200, 2
      %v1336 = vsel %vm1253, %v1334, %v1335
      %v1337 = vrot.slane %v1201, 2
      %v1338 = vsel %vm1253, %v1335, %v1337
      %v1390 = vadd.f32 %v1100, %v1256
      %v1391 = vadd.f32 %v1101, %v1258
      %v1392 = vadd.f32 %v1102, %v1257
      %v1393 = vadd.f32 %v1103, %v1261
      %v1394 = vadd.f32 %v1104, %v1263
      %v1395 = vadd.f32 %v1105, %v1262
      %v1396 = vadd.f32 %v1106, %v1266
      %v1397 = vadd.f32 %v1107, %v1268
      %v1398 = vadd.f32 %v1108, %v1267
      %v1399 = vadd.f32 %v1109, %v1271
      %v1400 = vadd.f32 %v1110, %v1273
      %v1401 = vadd.f32 %v1111, %v1272
      %v1402 = vadd.f32 %v1112, %v1276
      %v1403 = vadd.f32 %v1113, %v1278
      %v1404 = vadd.f32 %v1114, %v1277
      %v1405 = vadd.f32 %v1115, %v1281
      %v1406 = vadd.f32 %v1116, %v1283
      %v1407 = vadd.f32 %v1117, %v1282
      %v1408 = vadd.f32 %v1118, %v1286
      %v1409 = vadd.f32 %v1119, %v1288
      %v1410 = vadd.f32 %v1120, %v1287
      %v1411 = vadd.f32 %v1121, %v1291
      %v1412 = vadd.f32 %v1122, %v1293
      %v1413 = vadd.f32 %v1123, %v1292
      %v1414 = vadd.f32 %v1124, %v1296
      %v1415 = vadd.f32 %v1125, %v1298
      %v1416 = vadd.f32 %v1126, %v1297
      %v1417 = vadd.f32 %v1127, %v1301
      %v1418 = vadd.f32 %v1128, %v1303
      %v1419 = vadd.f32 %v1129, %v1302
      %v1420 = vadd.f32 %v1130, %v1306
      %v1421 = vadd.f32 %v1131, %v1308
      %v1422 = vadd.f32 %v1132, %v1307
      %v1423 = vadd.f32 %v1133, %v1311
      %v1424 = vadd.f32 %v1134, %v1313
      %v1425 = vadd.f32 %v1135, %v1312
      %v1426 = vadd.f32 %v1136, %v1316
      %v1427 = vadd.f32 %v1137, %v1318
      %v1428 = vadd.f32 %v1138, %v1317
      %v1429 = vadd.f32 %v1139, %v1321
      %v1430 = vadd.f32 %v1140, %v1323
      %v1431 = vadd.f32 %v1141, %v1322
      %v1432 = vadd.f32 %v1142, %v1326
      %v1433 = vadd.f32 %v1143, %v1328
      %v1434 = vadd.f32 %v1144, %v1327
      %v1435 = vadd.f32 %v1145, %v1331
      %v1436 = vadd.f32 %v1146, %v1333
      %v1437 = vadd.f32 %v1147, %v1332
      %v1438 = vadd.f32 %v1148, %v1336
      %v1439 = vadd.f32 %v1149, %v1338
      %v1440 = vadd.f32 %v1150, %v1337
      %v1441 = vmul.f32 %v776, 0.12578164
      %v1442 = vmul.f32 %v676, 0.12578164
      %v1443 = vmul.f32 %v793, 0.12578164
      %v1444 = vmul.f32 %v777, 0.12578164
      %v1445 = vmul.f32 %v679, 0.12578164
      %v1446 = vmul.f32 %v794, 0.12578164
      %v1447 = vmul.f32 %v778, 0.12578164
      %v1448 = vmul.f32 %v682, 0.12578164
      %v1449 = vmul.f32 %v795, 0.12578164
      %v1450 = vmul.f32 %v779, 0.12578164
      %v1451 = vmul.f32 %v685, 0.12578164
      %v1452 = vmul.f32 %v796, 0.12578164
      %v1453 = vmul.f32 %v780, 0.12578164
      %v1454 = vmul.f32 %v688, 0.12578164
      %v1455 = vmul.f32 %v797, 0.12578164
      %v1456 = vmul.f32 %v781, 0.12578164
      %v1457 = vmul.f32 %v691, 0.12578164
      %v1458 = vmul.f32 %v798, 0.12578164
      %v1459 = vmul.f32 %v782, 0.12578164
      %v1460 = vmul.f32 %v694, 0.12578164
      %v1461 = vmul.f32 %v799, 0.12578164
      %v1462 = vmul.f32 %v783, 0.12578164
      %v1463 = vmul.f32 %v697, 0.12578164
      %v1464 = vmul.f32 %v800, 0.12578164
      %v1465 = vmul.f32 %v784, 0.12578164
      %v1466 = vmul.f32 %v700, 0.12578164
      %v1467 = vmul.f32 %v801, 0.12578164
      %v1468 = vmul.f32 %v785, 0.12578164
      %v1469 = vmul.f32 %v703, 0.12578164
      %v1470 = vmul.f32 %v802, 0.12578164
      %v1471 = vmul.f32 %v786, 0.12578164
      %v1472 = vmul.f32 %v706, 0.12578164
      %v1473 = vmul.f32 %v803, 0.12578164
      %v1474 = vmul.f32 %v787, 0.12578164
      %v1475 = vmul.f32 %v709, 0.12578164
      %v1476 = vmul.f32 %v804, 0.12578164
      %v1477 = vmul.f32 %v788, 0.12578164
      %v1478 = vmul.f32 %v712, 0.12578164
      %v1479 = vmul.f32 %v805, 0.12578164
      %v1480 = vmul.f32 %v789, 0.12578164
      %v1481 = vmul.f32 %v715, 0.12578164
      %v1482 = vmul.f32 %v806, 0.12578164
      %v1483 = vmul.f32 %v790, 0.12578164
      %v1484 = vmul.f32 %v718, 0.12578164
      %v1485 = vmul.f32 %v807, 0.12578164
      %v1486 = vmul.f32 %v791, 0.12578164
      %v1487 = vmul.f32 %v721, 0.12578164
      %v1488 = vmul.f32 %v808, 0.12578164
      %v1489 = vmul.f32 %v792, 0.12578164
      %v1490 = vmul.f32 %v724, 0.12578164
      %v1491 = vmul.f32 %v809, 0.12578164
      %vm1543 = vcmask 1044480
      %v1544 = vrot.slane %v1441, 3
      %v1545 = vrot.slane %v1442, 3
      %v1546 = vsel %vm1543, %v1544, %v1545
      %v1547 = vrot.slane %v1443, 3
      %v1548 = vsel %vm1543, %v1545, %v1547
      %v1549 = vrot.slane %v1444, 3
      %v1550 = vrot.slane %v1445, 3
      %v1551 = vsel %vm1543, %v1549, %v1550
      %v1552 = vrot.slane %v1446, 3
      %v1553 = vsel %vm1543, %v1550, %v1552
      %v1554 = vrot.slane %v1447, 3
      %v1555 = vrot.slane %v1448, 3
      %v1556 = vsel %vm1543, %v1554, %v1555
      %v1557 = vrot.slane %v1449, 3
      %v1558 = vsel %vm1543, %v1555, %v1557
      %v1559 = vrot.slane %v1450, 3
      %v1560 = vrot.slane %v1451, 3
      %v1561 = vsel %vm1543, %v1559, %v1560
      %v1562 = vrot.slane %v1452, 3
      %v1563 = vsel %vm1543, %v1560, %v1562
      %v1564 = vrot.slane %v1453, 3
      %v1565 = vrot.slane %v1454, 3
      %v1566 = vsel %vm1543, %v1564, %v1565
      %v1567 = vrot.slane %v1455, 3
      %v1568 = vsel %vm1543, %v1565, %v1567
      %v1569 = vrot.slane %v1456, 3
      %v1570 = vrot.slane %v1457, 3
      %v1571 = vsel %vm1543, %v1569, %v1570
      %v1572 = vrot.slane %v1458, 3
      %v1573 = vsel %vm1543, %v1570, %v1572
      %v1574 = vrot.slane %v1459, 3
      %v1575 = vrot.slane %v1460, 3
      %v1576 = vsel %vm1543, %v1574, %v1575
      %v1577 = vrot.slane %v1461, 3
      %v1578 = vsel %vm1543, %v1575, %v1577
      %v1579 = vrot.slane %v1462, 3
      %v1580 = vrot.slane %v1463, 3
      %v1581 = vsel %vm1543, %v1579, %v1580
      %v1582 = vrot.slane %v1464, 3
      %v1583 = vsel %vm1543, %v1580, %v1582
      %v1584 = vrot.slane %v1465, 3
      %v1585 = vrot.slane %v1466, 3
      %v1586 = vsel %vm1543, %v1584, %v1585
      %v1587 = vrot.slane %v1467, 3
      %v1588 = vsel %vm1543, %v1585, %v1587
      %v1589 = vrot.slane %v1468, 3
      %v1590 = vrot.slane %v1469, 3
      %v1591 = vsel %vm1543, %v1589, %v1590
      %v1592 = vrot.slane %v1470, 3
      %v1593 = vsel %vm1543, %v1590, %v1592
      %v1594 = vrot.slane %v1471, 3
      %v1595 = vrot.slane %v1472, 3
      %v1596 = vsel %vm1543, %v1594, %v1595
      %v1597 = vrot.slane %v1473, 3
      %v1598 = vsel %vm1543, %v1595, %v1597
      %v1599 = vrot.slane %v1474, 3
      %v1600 = vrot.slane %v1475, 3
      %v1601 = vsel %vm1543, %v1599, %v1600
      %v1602 = vrot.slane %v1476, 3
      %v1603 = vsel %vm1543, %v1600, %v1602
      %v1604 = vrot.slane %v1477, 3
      %v1605 = vrot.slane %v1478, 3
      %v1606 = vsel %vm1543, %v1604, %v1605
      %v1607 = vrot.slane %v1479, 3
      %v1608 = vsel %vm1543, %v1605, %v1607
      %v1609 = vrot.slane %v1480, 3
      %v1610 = vrot.slane %v1481, 3
      %v1611 = vsel %vm1543, %v1609, %v1610
      %v1612 = vrot.slane %v1482, 3
      %v1613 = vsel %vm1543, %v1610, %v1612
      %v1614 = vrot.slane %v1483, 3
      %v1615 = vrot.slane %v1484, 3
      %v1616 = vsel %vm1543, %v1614, %v1615
      %v1617 = vrot.slane %v1485, 3
      %v1618 = vsel %vm1543, %v1615, %v1617
      %v1619 = vrot.slane %v1486, 3
      %v1620 = vrot.slane %v1487, 3
      %v1621 = vsel %vm1543, %v1619, %v1620
      %v1622 = vrot.slane %v1488, 3
      %v1623 = vsel %vm1543, %v1620, %v1622
      %v1624 = vrot.slane %v1489, 3
      %v1625 = vrot.slane %v1490, 3
      %v1626 = vsel %vm1543, %v1624, %v1625
      %v1627 = vrot.slane %v1491, 3
      %v1628 = vsel %vm1543, %v1625, %v1627
      %v1680 = vadd.f32 %v1390, %v1546
      %v1681 = vadd.f32 %v1391, %v1548
      %v1682 = vadd.f32 %v1392, %v1547
      %v1683 = vadd.f32 %v1393, %v1551
      %v1684 = vadd.f32 %v1394, %v1553
      %v1685 = vadd.f32 %v1395, %v1552
      %v1686 = vadd.f32 %v1396, %v1556
      %v1687 = vadd.f32 %v1397, %v1558
      %v1688 = vadd.f32 %v1398, %v1557
      %v1689 = vadd.f32 %v1399, %v1561
      %v1690 = vadd.f32 %v1400, %v1563
      %v1691 = vadd.f32 %v1401, %v1562
      %v1692 = vadd.f32 %v1402, %v1566
      %v1693 = vadd.f32 %v1403, %v1568
      %v1694 = vadd.f32 %v1404, %v1567
      %v1695 = vadd.f32 %v1405, %v1571
      %v1696 = vadd.f32 %v1406, %v1573
      %v1697 = vadd.f32 %v1407, %v1572
      %v1698 = vadd.f32 %v1408, %v1576
      %v1699 = vadd.f32 %v1409, %v1578
      %v1700 = vadd.f32 %v1410, %v1577
      %v1701 = vadd.f32 %v1411, %v1581
      %v1702 = vadd.f32 %v1412, %v1583
      %v1703 = vadd.f32 %v1413, %v1582
      %v1704 = vadd.f32 %v1414, %v1586
      %v1705 = vadd.f32 %v1415, %v1588
      %v1706 = vadd.f32 %v1416, %v1587
      %v1707 = vadd.f32 %v1417, %v1591
      %v1708 = vadd.f32 %v1418, %v1593
      %v1709 = vadd.f32 %v1419, %v1592
      %v1710 = vadd.f32 %v1420, %v1596
      %v1711 = vadd.f32 %v1421, %v1598
      %v1712 = vadd.f32 %v1422, %v1597
      %v1713 = vadd.f32 %v1423, %v1601
      %v1714 = vadd.f32 %v1424, %v1603
      %v1715 = vadd.f32 %v1425, %v1602
      %v1716 = vadd.f32 %v1426, %v1606
      %v1717 = vadd.f32 %v1427, %v1608
      %v1718 = vadd.f32 %v1428, %v1607
      %v1719 = vadd.f32 %v1429, %v1611
      %v1720 = vadd.f32 %v1430, %v1613
      %v1721 = vadd.f32 %v1431, %v1612
      %v1722 = vadd.f32 %v1432, %v1616
      %v1723 = vadd.f32 %v1433, %v1618
      %v1724 = vadd.f32 %v1434, %v1617
      %v1725 = vadd.f32 %v1435, %v1621
      %v1726 = vadd.f32 %v1436, %v1623
      %v1727 = vadd.f32 %v1437, %v1622
      %v1728 = vadd.f32 %v1438, %v1626
      %v1729 = vadd.f32 %v1439, %v1628
      %v1730 = vadd.f32 %v1440, %v1627
      %v1731 = vrot.slane %v1441, 4
      %v1732 = vrot.slane %v1442, 4
      %v1733 = vsel %vm673, %v1731, %v1732
      %v1734 = vrot.slane %v1443, 4
      %v1735 = vsel %vm673, %v1732, %v1734
      %v1736 = vrot.slane %v1444, 4
      %v1737 = vrot.slane %v1445, 4
      %v1738 = vsel %vm673, %v1736, %v1737
      %v1739 = vrot.slane %v1446, 4
      %v1740 = vsel %vm673, %v1737, %v1739
      %v1741 = vrot.slane %v1447, 4
      %v1742 = vrot.slane %v1448, 4
      %v1743 = vsel %vm673, %v1741, %v1742
      %v1744 = vrot.slane %v1449, 4
      %v1745 = vsel %vm673, %v1742, %v1744
      %v1746 = vrot.slane %v1450, 4
      %v1747 = vrot.slane %v1451, 4
      %v1748 = vsel %vm673, %v1746, %v1747
      %v1749 = vrot.slane %v1452, 4
      %v1750 = vsel %vm673, %v1747, %v1749
      %v1751 = vrot.slane %v1453, 4
      %v1752 = vrot.slane %v1454, 4
      %v1753 = vsel %vm673, %v1751, %v1752
      %v1754 = vrot.slane %v1455, 4
      %v1755 = vsel %vm673, %v1752, %v1754
      %v1756 = vrot.slane %v1456, 4
      %v1757 = vrot.slane %v1457, 4
      %v1758 = vsel %vm673, %v1756, %v1757
      %v1759 = vrot.slane %v1458, 4
      %v1760 = vsel %vm673, %v1757, %v1759
      %v1761 = vrot.slane %v1459, 4
      %v1762 = vrot.slane %v1460, 4
      %v1763 = vsel %vm673, %v1761, %v1762
      %v1764 = vrot.slane %v1461, 4
      %v1765 = vsel %vm673, %v1762, %v1764
      %v1766 = vrot.slane %v1462, 4
      %v1767 = vrot.slane %v1463, 4
      %v1768 = vsel %vm673, %v1766, %v1767
      %v1769 = vrot.slane %v1464, 4
      %v1770 = vsel %vm673, %v1767, %v1769
      %v1771 = vrot.slane %v1465, 4
      %v1772 = vrot.slane %v1466, 4
      %v1773 = vsel %vm673, %v1771, %v1772
      %v1774 = vrot.slane %v1467, 4
      %v1775 = vsel %vm673, %v1772, %v1774
      %v1776 = vrot.slane %v1468, 4
      %v1777 = vrot.slane %v1469, 4
      %v1778 = vsel %vm673, %v1776, %v1777
      %v1779 = vrot.slane %v1470, 4
      %v1780 = vsel %vm673, %v1777, %v1779
      %v1781 = vrot.slane %v1471, 4
      %v1782 = vrot.slane %v1472, 4
      %v1783 = vsel %vm673, %v1781, %v1782
      %v1784 = vrot.slane %v1473, 4
      %v1785 = vsel %vm673, %v1782, %v1784
      %v1786 = vrot.slane %v1474, 4
      %v1787 = vrot.slane %v1475, 4
      %v1788 = vsel %vm673, %v1786, %v1787
      %v1789 = vrot.slane %v1476, 4
      %v1790 = vsel %vm673, %v1787, %v1789
      %v1791 = vrot.slane %v1477, 4
      %v1792 = vrot.slane %v1478, 4
      %v1793 = vsel %vm673, %v1791, %v1792
      %v1794 = vrot.slane %v1479, 4
      %v1795 = vsel %vm673, %v1792, %v1794
      %v1796 = vrot.slane %v1480, 4
      %v1797 = vrot.slane %v1481, 4
      %v1798 = vsel %vm673, %v1796, %v1797
      %v1799 = vrot.slane %v1482, 4
      %v1800 = vsel %vm673, %v1797, %v1799
      %v1801 = vrot.slane %v1483, 4
      %v1802 = vrot.slane %v1484, 4
      %v1803 = vsel %vm673, %v1801, %v1802
      %v1804 = vrot.slane %v1485, 4
      %v1805 = vsel %vm673, %v1802, %v1804
      %v1806 = vrot.slane %v1486, 4
      %v1807 = vrot.slane %v1487, 4
      %v1808 = vsel %vm673, %v1806, %v1807
      %v1809 = vrot.slane %v1488, 4
      %v1810 = vsel %vm673, %v1807, %v1809
      %v1811 = vrot.slane %v1489, 4
      %v1812 = vrot.slane %v1490, 4
      %v1813 = vsel %vm673, %v1811, %v1812
      %v1814 = vrot.slane %v1491, 4
      %v1815 = vsel %vm673, %v1812, %v1814
      %v1867 = vadd.f32 %v1680, %v1733
      %v1868 = vadd.f32 %v1681, %v1735
      %v1869 = vadd.f32 %v1682, %v1734
      %v1870 = vadd.f32 %v1683, %v1738
      %v1871 = vadd.f32 %v1684, %v1740
      %v1872 = vadd.f32 %v1685, %v1739
      %v1873 = vadd.f32 %v1686, %v1743
      %v1874 = vadd.f32 %v1687, %v1745
      %v1875 = vadd.f32 %v1688, %v1744
      %v1876 = vadd.f32 %v1689, %v1748
      %v1877 = vadd.f32 %v1690, %v1750
      %v1878 = vadd.f32 %v1691, %v1749
      %v1879 = vadd.f32 %v1692, %v1753
      %v1880 = vadd.f32 %v1693, %v1755
      %v1881 = vadd.f32 %v1694, %v1754
      %v1882 = vadd.f32 %v1695, %v1758
      %v1883 = vadd.f32 %v1696, %v1760
      %v1884 = vadd.f32 %v1697, %v1759
      %v1885 = vadd.f32 %v1698, %v1763
      %v1886 = vadd.f32 %v1699, %v1765
      %v1887 = vadd.f32 %v1700, %v1764
      %v1888 = vadd.f32 %v1701, %v1768
      %v1889 = vadd.f32 %v1702, %v1770
      %v1890 = vadd.f32 %v1703, %v1769
      %v1891 = vadd.f32 %v1704, %v1773
      %v1892 = vadd.f32 %v1705, %v1775
      %v1893 = vadd.f32 %v1706, %v1774
      %v1894 = vadd.f32 %v1707, %v1778
      %v1895 = vadd.f32 %v1708, %v1780
      %v1896 = vadd.f32 %v1709, %v1779
      %v1897 = vadd.f32 %v1710, %v1783
      %v1898 = vadd.f32 %v1711, %v1785
      %v1899 = vadd.f32 %v1712, %v1784
      %v1900 = vadd.f32 %v1713, %v1788
      %v1901 = vadd.f32 %v1714, %v1790
      %v1902 = vadd.f32 %v1715, %v1789
      %v1903 = vadd.f32 %v1716, %v1793
      %v1904 = vadd.f32 %v1717, %v1795
      %v1905 = vadd.f32 %v1718, %v1794
      %v1906 = vadd.f32 %v1719, %v1798
      %v1907 = vadd.f32 %v1720, %v1800
      %v1908 = vadd.f32 %v1721, %v1799
      %v1909 = vadd.f32 %v1722, %v1803
      %v1910 = vadd.f32 %v1723, %v1805
      %v1911 = vadd.f32 %v1724, %v1804
      %v1912 = vadd.f32 %v1725, %v1808
      %v1913 = vadd.f32 %v1726, %v1810
      %v1914 = vadd.f32 %v1727, %v1809
      %v1915 = vadd.f32 %v1728, %v1813
      %v1916 = vadd.f32 %v1729, %v1815
      %v1917 = vadd.f32 %v1730, %v1814
      %vm1918 = vcmask 1042432
      %v1919 = vrot.slane %v1151, 5
      %v1920 = vrot.slane %v1152, 5
      %v1921 = vsel %vm1918, %v1919, %v1920
      %v1922 = vrot.slane %v1153, 5
      %v1923 = vsel %vm1918, %v1920, %v1922
      %v1924 = vrot.slane %v1154, 5
      %v1925 = vrot.slane %v1155, 5
      %v1926 = vsel %vm1918, %v1924, %v1925
      %v1927 = vrot.slane %v1156, 5
      %v1928 = vsel %vm1918, %v1925, %v1927
      %v1929 = vrot.slane %v1157, 5
      %v1930 = vrot.slane %v1158, 5
      %v1931 = vsel %vm1918, %v1929, %v1930
      %v1932 = vrot.slane %v1159, 5
      %v1933 = vsel %vm1918, %v1930, %v1932
      %v1934 = vrot.slane %v1160, 5
      %v1935 = vrot.slane %v1161, 5
      %v1936 = vsel %vm1918, %v1934, %v1935
      %v1937 = vrot.slane %v1162, 5
      %v1938 = vsel %vm1918, %v1935, %v1937
      %v1939 = vrot.slane %v1163, 5
      %v1940 = vrot.slane %v1164, 5
      %v1941 = vsel %vm1918, %v1939, %v1940
      %v1942 = vrot.slane %v1165, 5
      %v1943 = vsel %vm1918, %v1940, %v1942
      %v1944 = vrot.slane %v1166, 5
      %v1945 = vrot.slane %v1167, 5
      %v1946 = vsel %vm1918, %v1944, %v1945
      %v1947 = vrot.slane %v1168, 5
      %v1948 = vsel %vm1918, %v1945, %v1947
      %v1949 = vrot.slane %v1169, 5
      %v1950 = vrot.slane %v1170, 5
      %v1951 = vsel %vm1918, %v1949, %v1950
      %v1952 = vrot.slane %v1171, 5
      %v1953 = vsel %vm1918, %v1950, %v1952
      %v1954 = vrot.slane %v1172, 5
      %v1955 = vrot.slane %v1173, 5
      %v1956 = vsel %vm1918, %v1954, %v1955
      %v1957 = vrot.slane %v1174, 5
      %v1958 = vsel %vm1918, %v1955, %v1957
      %v1959 = vrot.slane %v1175, 5
      %v1960 = vrot.slane %v1176, 5
      %v1961 = vsel %vm1918, %v1959, %v1960
      %v1962 = vrot.slane %v1177, 5
      %v1963 = vsel %vm1918, %v1960, %v1962
      %v1964 = vrot.slane %v1178, 5
      %v1965 = vrot.slane %v1179, 5
      %v1966 = vsel %vm1918, %v1964, %v1965
      %v1967 = vrot.slane %v1180, 5
      %v1968 = vsel %vm1918, %v1965, %v1967
      %v1969 = vrot.slane %v1181, 5
      %v1970 = vrot.slane %v1182, 5
      %v1971 = vsel %vm1918, %v1969, %v1970
      %v1972 = vrot.slane %v1183, 5
      %v1973 = vsel %vm1918, %v1970, %v1972
      %v1974 = vrot.slane %v1184, 5
      %v1975 = vrot.slane %v1185, 5
      %v1976 = vsel %vm1918, %v1974, %v1975
      %v1977 = vrot.slane %v1186, 5
      %v1978 = vsel %vm1918, %v1975, %v1977
      %v1979 = vrot.slane %v1187, 5
      %v1980 = vrot.slane %v1188, 5
      %v1981 = vsel %vm1918, %v1979, %v1980
      %v1982 = vrot.slane %v1189, 5
      %v1983 = vsel %vm1918, %v1980, %v1982
      %v1984 = vrot.slane %v1190, 5
      %v1985 = vrot.slane %v1191, 5
      %v1986 = vsel %vm1918, %v1984, %v1985
      %v1987 = vrot.slane %v1192, 5
      %v1988 = vsel %vm1918, %v1985, %v1987
      %v1989 = vrot.slane %v1193, 5
      %v1990 = vrot.slane %v1194, 5
      %v1991 = vsel %vm1918, %v1989, %v1990
      %v1992 = vrot.slane %v1195, 5
      %v1993 = vsel %vm1918, %v1990, %v1992
      %v1994 = vrot.slane %v1196, 5
      %v1995 = vrot.slane %v1197, 5
      %v1996 = vsel %vm1918, %v1994, %v1995
      %v1997 = vrot.slane %v1198, 5
      %v1998 = vsel %vm1918, %v1995, %v1997
      %v1999 = vrot.slane %v1199, 5
      %v2000 = vrot.slane %v1200, 5
      %v2001 = vsel %vm1918, %v1999, %v2000
      %v2002 = vrot.slane %v1201, 5
      %v2003 = vsel %vm1918, %v2000, %v2002
      %v2055 = vadd.f32 %v1867, %v1921
      %v2056 = vadd.f32 %v1868, %v1923
      %v2057 = vadd.f32 %v1869, %v1922
      %v2058 = vadd.f32 %v1870, %v1926
      %v2059 = vadd.f32 %v1871, %v1928
      %v2060 = vadd.f32 %v1872, %v1927
      %v2061 = vadd.f32 %v1873, %v1931
      %v2062 = vadd.f32 %v1874, %v1933
      %v2063 = vadd.f32 %v1875, %v1932
      %v2064 = vadd.f32 %v1876, %v1936
      %v2065 = vadd.f32 %v1877, %v1938
      %v2066 = vadd.f32 %v1878, %v1937
      %v2067 = vadd.f32 %v1879, %v1941
      %v2068 = vadd.f32 %v1880, %v1943
      %v2069 = vadd.f32 %v1881, %v1942
      %v2070 = vadd.f32 %v1882, %v1946
      %v2071 = vadd.f32 %v1883, %v1948
      %v2072 = vadd.f32 %v1884, %v1947
      %v2073 = vadd.f32 %v1885, %v1951
      %v2074 = vadd.f32 %v1886, %v1953
      %v2075 = vadd.f32 %v1887, %v1952
      %v2076 = vadd.f32 %v1888, %v1956
      %v2077 = vadd.f32 %v1889, %v1958
      %v2078 = vadd.f32 %v1890, %v1957
      %v2079 = vadd.f32 %v1891, %v1961
      %v2080 = vadd.f32 %v1892, %v1963
      %v2081 = vadd.f32 %v1893, %v1962
      %v2082 = vadd.f32 %v1894, %v1966
      %v2083 = vadd.f32 %v1895, %v1968
      %v2084 = vadd.f32 %v1896, %v1967
      %v2085 = vadd.f32 %v1897, %v1971
      %v2086 = vadd.f32 %v1898, %v1973
      %v2087 = vadd.f32 %v1899, %v1972
      %v2088 = vadd.f32 %v1900, %v1976
      %v2089 = vadd.f32 %v1901, %v1978
      %v2090 = vadd.f32 %v1902, %v1977
      %v2091 = vadd.f32 %v1903, %v1981
      %v2092 = vadd.f32 %v1904, %v1983
      %v2093 = vadd.f32 %v1905, %v1982
      %v2094 = vadd.f32 %v1906, %v1986
      %v2095 = vadd.f32 %v1907, %v1988
      %v2096 = vadd.f32 %v1908, %v1987
      %v2097 = vadd.f32 %v1909, %v1991
      %v2098 = vadd.f32 %v1910, %v1993
      %v2099 = vadd.f32 %v1911, %v1992
      %v2100 = vadd.f32 %v1912, %v1996
      %v2101 = vadd.f32 %v1913, %v1998
      %v2102 = vadd.f32 %v1914, %v1997
      %v2103 = vadd.f32 %v1915, %v2001
      %v2104 = vadd.f32 %v1916, %v2003
      %v2105 = vadd.f32 %v1917, %v2002
      %vm2106 = vcmask 1041408
      %v2107 = vrot.slane %v861, 6
      %v2108 = vrot.slane %v862, 6
      %v2109 = vsel %vm2106, %v2107, %v2108
      %v2110 = vrot.slane %v863, 6
      %v2111 = vsel %vm2106, %v2108, %v2110
      %v2112 = vrot.slane %v864, 6
      %v2113 = vrot.slane %v865, 6
      %v2114 = vsel %vm2106, %v2112, %v2113
      %v2115 = vrot.slane %v866, 6
      %v2116 = vsel %vm2106, %v2113, %v2115
      %v2117 = vrot.slane %v867, 6
      %v2118 = vrot.slane %v868, 6
      %v2119 = vsel %vm2106, %v2117, %v2118
      %v2120 = vrot.slane %v869, 6
      %v2121 = vsel %vm2106, %v2118, %v2120
      %v2122 = vrot.slane %v870, 6
      %v2123 = vrot.slane %v871, 6
      %v2124 = vsel %vm2106, %v2122, %v2123
      %v2125 = vrot.slane %v872, 6
      %v2126 = vsel %vm2106, %v2123, %v2125
      %v2127 = vrot.slane %v873, 6
      %v2128 = vrot.slane %v874, 6
      %v2129 = vsel %vm2106, %v2127, %v2128
      %v2130 = vrot.slane %v875, 6
      %v2131 = vsel %vm2106, %v2128, %v2130
      %v2132 = vrot.slane %v876, 6
      %v2133 = vrot.slane %v877, 6
      %v2134 = vsel %vm2106, %v2132, %v2133
      %v2135 = vrot.slane %v878, 6
      %v2136 = vsel %vm2106, %v2133, %v2135
      %v2137 = vrot.slane %v879, 6
      %v2138 = vrot.slane %v880, 6
      %v2139 = vsel %vm2106, %v2137, %v2138
      %v2140 = vrot.slane %v881, 6
      %v2141 = vsel %vm2106, %v2138, %v2140
      %v2142 = vrot.slane %v882, 6
      %v2143 = vrot.slane %v883, 6
      %v2144 = vsel %vm2106, %v2142, %v2143
      %v2145 = vrot.slane %v884, 6
      %v2146 = vsel %vm2106, %v2143, %v2145
      %v2147 = vrot.slane %v885, 6
      %v2148 = vrot.slane %v886, 6
      %v2149 = vsel %vm2106, %v2147, %v2148
      %v2150 = vrot.slane %v887, 6
      %v2151 = vsel %vm2106, %v2148, %v2150
      %v2152 = vrot.slane %v888, 6
      %v2153 = vrot.slane %v889, 6
      %v2154 = vsel %vm2106, %v2152, %v2153
      %v2155 = vrot.slane %v890, 6
      %v2156 = vsel %vm2106, %v2153, %v2155
      %v2157 = vrot.slane %v891, 6
      %v2158 = vrot.slane %v892, 6
      %v2159 = vsel %vm2106, %v2157, %v2158
      %v2160 = vrot.slane %v893, 6
      %v2161 = vsel %vm2106, %v2158, %v2160
      %v2162 = vrot.slane %v894, 6
      %v2163 = vrot.slane %v895, 6
      %v2164 = vsel %vm2106, %v2162, %v2163
      %v2165 = vrot.slane %v896, 6
      %v2166 = vsel %vm2106, %v2163, %v2165
      %v2167 = vrot.slane %v897, 6
      %v2168 = vrot.slane %v898, 6
      %v2169 = vsel %vm2106, %v2167, %v2168
      %v2170 = vrot.slane %v899, 6
      %v2171 = vsel %vm2106, %v2168, %v2170
      %v2172 = vrot.slane %v900, 6
      %v2173 = vrot.slane %v901, 6
      %v2174 = vsel %vm2106, %v2172, %v2173
      %v2175 = vrot.slane %v902, 6
      %v2176 = vsel %vm2106, %v2173, %v2175
      %v2177 = vrot.slane %v903, 6
      %v2178 = vrot.slane %v904, 6
      %v2179 = vsel %vm2106, %v2177, %v2178
      %v2180 = vrot.slane %v905, 6
      %v2181 = vsel %vm2106, %v2178, %v2180
      %v2182 = vrot.slane %v906, 6
      %v2183 = vrot.slane %v907, 6
      %v2184 = vsel %vm2106, %v2182, %v2183
      %v2185 = vrot.slane %v908, 6
      %v2186 = vsel %vm2106, %v2183, %v2185
      %v2187 = vrot.slane %v909, 6
      %v2188 = vrot.slane %v910, 6
      %v2189 = vsel %vm2106, %v2187, %v2188
      %v2190 = vrot.slane %v911, 6
      %v2191 = vsel %vm2106, %v2188, %v2190
      %v2243 = vadd.f32 %v2055, %v2109
      %v2244 = vadd.f32 %v2056, %v2111
      %v2245 = vadd.f32 %v2057, %v2110
      %v2246 = vadd.f32 %v2058, %v2114
      %v2247 = vadd.f32 %v2059, %v2116
      %v2248 = vadd.f32 %v2060, %v2115
      %v2249 = vadd.f32 %v2061, %v2119
      %v2250 = vadd.f32 %v2062, %v2121
      %v2251 = vadd.f32 %v2063, %v2120
      %v2252 = vadd.f32 %v2064, %v2124
      %v2253 = vadd.f32 %v2065, %v2126
      %v2254 = vadd.f32 %v2066, %v2125
      %v2255 = vadd.f32 %v2067, %v2129
      %v2256 = vadd.f32 %v2068, %v2131
      %v2257 = vadd.f32 %v2069, %v2130
      %v2258 = vadd.f32 %v2070, %v2134
      %v2259 = vadd.f32 %v2071, %v2136
      %v2260 = vadd.f32 %v2072, %v2135
      %v2261 = vadd.f32 %v2073, %v2139
      %v2262 = vadd.f32 %v2074, %v2141
      %v2263 = vadd.f32 %v2075, %v2140
      %v2264 = vadd.f32 %v2076, %v2144
      %v2265 = vadd.f32 %v2077, %v2146
      %v2266 = vadd.f32 %v2078, %v2145
      %v2267 = vadd.f32 %v2079, %v2149
      %v2268 = vadd.f32 %v2080, %v2151
      %v2269 = vadd.f32 %v2081, %v2150
      %v2270 = vadd.f32 %v2082, %v2154
      %v2271 = vadd.f32 %v2083, %v2156
      %v2272 = vadd.f32 %v2084, %v2155
      %v2273 = vadd.f32 %v2085, %v2159
      %v2274 = vadd.f32 %v2086, %v2161
      %v2275 = vadd.f32 %v2087, %v2160
      %v2276 = vadd.f32 %v2088, %v2164
      %v2277 = vadd.f32 %v2089, %v2166
      %v2278 = vadd.f32 %v2090, %v2165
      %v2279 = vadd.f32 %v2091, %v2169
      %v2280 = vadd.f32 %v2092, %v2171
      %v2281 = vadd.f32 %v2093, %v2170
      %v2282 = vadd.f32 %v2094, %v2174
      %v2283 = vadd.f32 %v2095, %v2176
      %v2284 = vadd.f32 %v2096, %v2175
      %v2285 = vadd.f32 %v2097, %v2179
      %v2286 = vadd.f32 %v2098, %v2181
      %v2287 = vadd.f32 %v2099, %v2180
      %v2288 = vadd.f32 %v2100, %v2184
      %v2289 = vadd.f32 %v2101, %v2186
      %v2290 = vadd.f32 %v2102, %v2185
      %v2291 = vadd.f32 %v2103, %v2189
      %v2292 = vadd.f32 %v2104, %v2191
      %v2293 = vadd.f32 %v2105, %v2190
      %vm2345 = vcmask 1040384
      %v2346 = vrot.slane %v810, 7
      %v2347 = vrot.slane %v811, 7
      %v2348 = vsel %vm2345, %v2346, %v2347
      %v2349 = vrot.slane %v812, 7
      %v2350 = vsel %vm2345, %v2347, %v2349
      %v2351 = vrot.slane %v813, 7
      %v2352 = vrot.slane %v814, 7
      %v2353 = vsel %vm2345, %v2351, %v2352
      %v2354 = vrot.slane %v815, 7
      %v2355 = vsel %vm2345, %v2352, %v2354
      %v2356 = vrot.slane %v816, 7
      %v2357 = vrot.slane %v817, 7
      %v2358 = vsel %vm2345, %v2356, %v2357
      %v2359 = vrot.slane %v818, 7
      %v2360 = vsel %vm2345, %v2357, %v2359
      %v2361 = vrot.slane %v819, 7
      %v2362 = vrot.slane %v820, 7
      %v2363 = vsel %vm2345, %v2361, %v2362
      %v2364 = vrot.slane %v821, 7
      %v2365 = vsel %vm2345, %v2362, %v2364
      %v2366 = vrot.slane %v822, 7
      %v2367 = vrot.slane %v823, 7
      %v2368 = vsel %vm2345, %v2366, %v2367
      %v2369 = vrot.slane %v824, 7
      %v2370 = vsel %vm2345, %v2367, %v2369
      %v2371 = vrot.slane %v825, 7
      %v2372 = vrot.slane %v826, 7
      %v2373 = vsel %vm2345, %v2371, %v2372
      %v2374 = vrot.slane %v827, 7
      %v2375 = vsel %vm2345, %v2372, %v2374
      %v2376 = vrot.slane %v828, 7
      %v2377 = vrot.slane %v829, 7
      %v2378 = vsel %vm2345, %v2376, %v2377
      %v2379 = vrot.slane %v830, 7
      %v2380 = vsel %vm2345, %v2377, %v2379
      %v2381 = vrot.slane %v831, 7
      %v2382 = vrot.slane %v832, 7
      %v2383 = vsel %vm2345, %v2381, %v2382
      %v2384 = vrot.slane %v833, 7
      %v2385 = vsel %vm2345, %v2382, %v2384
      %v2386 = vrot.slane %v834, 7
      %v2387 = vrot.slane %v835, 7
      %v2388 = vsel %vm2345, %v2386, %v2387
      %v2389 = vrot.slane %v836, 7
      %v2390 = vsel %vm2345, %v2387, %v2389
      %v2391 = vrot.slane %v837, 7
      %v2392 = vrot.slane %v838, 7
      %v2393 = vsel %vm2345, %v2391, %v2392
      %v2394 = vrot.slane %v839, 7
      %v2395 = vsel %vm2345, %v2392, %v2394
      %v2396 = vrot.slane %v840, 7
      %v2397 = vrot.slane %v841, 7
      %v2398 = vsel %vm2345, %v2396, %v2397
      %v2399 = vrot.slane %v842, 7
      %v2400 = vsel %vm2345, %v2397, %v2399
      %v2401 = vrot.slane %v843, 7
      %v2402 = vrot.slane %v844, 7
      %v2403 = vsel %vm2345, %v2401, %v2402
      %v2404 = vrot.slane %v845, 7
      %v2405 = vsel %vm2345, %v2402, %v2404
      %v2406 = vrot.slane %v846, 7
      %v2407 = vrot.slane %v847, 7
      %v2408 = vsel %vm2345, %v2406, %v2407
      %v2409 = vrot.slane %v848, 7
      %v2410 = vsel %vm2345, %v2407, %v2409
      %v2411 = vrot.slane %v849, 7
      %v2412 = vrot.slane %v850, 7
      %v2413 = vsel %vm2345, %v2411, %v2412
      %v2414 = vrot.slane %v851, 7
      %v2415 = vsel %vm2345, %v2412, %v2414
      %v2416 = vrot.slane %v852, 7
      %v2417 = vrot.slane %v853, 7
      %v2418 = vsel %vm2345, %v2416, %v2417
      %v2419 = vrot.slane %v854, 7
      %v2420 = vsel %vm2345, %v2417, %v2419
      %v2421 = vrot.slane %v855, 7
      %v2422 = vrot.slane %v856, 7
      %v2423 = vsel %vm2345, %v2421, %v2422
      %v2424 = vrot.slane %v857, 7
      %v2425 = vsel %vm2345, %v2422, %v2424
      %v2426 = vrot.slane %v858, 7
      %v2427 = vrot.slane %v859, 7
      %v2428 = vsel %vm2345, %v2426, %v2427
      %v2429 = vrot.slane %v860, 7
      %v2430 = vsel %vm2345, %v2427, %v2429
      %v2482 = vadd.f32 %v2243, %v2348
      %v2483 = vadd.f32 %v2244, %v2350
      %v2484 = vadd.f32 %v2245, %v2349
      %v2485 = vadd.f32 %v2246, %v2353
      %v2486 = vadd.f32 %v2247, %v2355
      %v2487 = vadd.f32 %v2248, %v2354
      %v2488 = vadd.f32 %v2249, %v2358
      %v2489 = vadd.f32 %v2250, %v2360
      %v2490 = vadd.f32 %v2251, %v2359
      %v2491 = vadd.f32 %v2252, %v2363
      %v2492 = vadd.f32 %v2253, %v2365
      %v2493 = vadd.f32 %v2254, %v2364
      %v2494 = vadd.f32 %v2255, %v2368
      %v2495 = vadd.f32 %v2256, %v2370
      %v2496 = vadd.f32 %v2257, %v2369
      %v2497 = vadd.f32 %v2258, %v2373
      %v2498 = vadd.f32 %v2259, %v2375
      %v2499 = vadd.f32 %v2260, %v2374
      %v2500 = vadd.f32 %v2261, %v2378
      %v2501 = vadd.f32 %v2262, %v2380
      %v2502 = vadd.f32 %v2263, %v2379
      %v2503 = vadd.f32 %v2264, %v2383
      %v2504 = vadd.f32 %v2265, %v2385
      %v2505 = vadd.f32 %v2266, %v2384
      %v2506 = vadd.f32 %v2267, %v2388
      %v2507 = vadd.f32 %v2268, %v2390
      %v2508 = vadd.f32 %v2269, %v2389
      %v2509 = vadd.f32 %v2270, %v2393
      %v2510 = vadd.f32 %v2271, %v2395
      %v2511 = vadd.f32 %v2272, %v2394
      %v2512 = vadd.f32 %v2273, %v2398
      %v2513 = vadd.f32 %v2274, %v2400
      %v2514 = vadd.f32 %v2275, %v2399
      %v2515 = vadd.f32 %v2276, %v2403
      %v2516 = vadd.f32 %v2277, %v2405
      %v2517 = vadd.f32 %v2278, %v2404
      %v2518 = vadd.f32 %v2279, %v2408
      %v2519 = vadd.f32 %v2280, %v2410
      %v2520 = vadd.f32 %v2281, %v2409
      %v2521 = vadd.f32 %v2282, %v2413
      %v2522 = vadd.f32 %v2283, %v2415
      %v2523 = vadd.f32 %v2284, %v2414
      %v2524 = vadd.f32 %v2285, %v2418
      %v2525 = vadd.f32 %v2286, %v2420
      %v2526 = vadd.f32 %v2287, %v2419
      %v2527 = vadd.f32 %v2288, %v2423
      %v2528 = vadd.f32 %v2289, %v2425
      %v2529 = vadd.f32 %v2290, %v2424
      %v2530 = vadd.f32 %v2291, %v2428
      %v2531 = vadd.f32 %v2292, %v2430
      %v2532 = vadd.f32 %v2293, %v2429
      %vm2533 = vcmask 31744
      %2534 = vst.msk [vmem:[%s116] sm:$0xff] %vm2533, %v2482
      %2535 = vst.msk [vmem:[%s116 + $0x8] sm:$0xff] %vm2533, %v2483
      %vm2536 = vcmask 24576
      %2537 = vst.msk [vmem:[%s116 + $0x10] sm:$0x1] %vm2536, %v2484
      %2538 = vst.msk [vmem:[%s116 + $0x18] sm:$0xff] %vm2533, %v2485
      %2539 = vst.msk [vmem:[%s116 + $0x20] sm:$0xff] %vm2533, %v2486
      %2540 = vst.msk [vmem:[%s116 + $0x28] sm:$0x1] %vm2536, %v2487
      %2541 = vst.msk [vmem:[%s116 + $0x30] sm:$0xff] %vm2533, %v2488
      %2542 = vst.msk [vmem:[%s116 + $0x38] sm:$0xff] %vm2533, %v2489
      %2543 = vst.msk [vmem:[%s116 + $0x40] sm:$0x1] %vm2536, %v2490
      %2544 = vst.msk [vmem:[%s116 + $0x48] sm:$0xff] %vm2533, %v2491
      %2545 = vst.msk [vmem:[%s116 + $0x50] sm:$0xff] %vm2533, %v2492
      %2546 = vst.msk [vmem:[%s116 + $0x58] sm:$0x1] %vm2536, %v2493
      %2547 = vst.msk [vmem:[%s116 + $0x60] sm:$0xff] %vm2533, %v2494
      %2548 = vst.msk [vmem:[%s116 + $0x68] sm:$0xff] %vm2533, %v2495
      %2549 = vst.msk [vmem:[%s116 + $0x70] sm:$0x1] %vm2536, %v2496
      %2550 = vst.msk [vmem:[%s116 + $0x78] sm:$0xff] %vm2533, %v2497
      %2551 = vst.msk [vmem:[%s116 + $0x80] sm:$0xff] %vm2533, %v2498
      %2552 = vst.msk [vmem:[%s116 + $0x88] sm:$0x1] %vm2536, %v2499
      %2553 = vst.msk [vmem:[%s116 + $0x90] sm:$0xff] %vm2533, %v2500
      %2554 = vst.msk [vmem:[%s116 + $0x98] sm:$0xff] %vm2533, %v2501
      %2555 = vst.msk [vmem:[%s116 + $0xa0] sm:$0x1] %vm2536, %v2502
      %2556 = vst.msk [vmem:[%s116 + $0xa8] sm:$0xff] %vm2533, %v2503
      %2557 = vst.msk [vmem:[%s116 + $0xb0] sm:$0xff] %vm2533, %v2504
      %2558 = vst.msk [vmem:[%s116 + $0xb8] sm:$0x1] %vm2536, %v2505
      %2559 = vst.msk [vmem:[%s116 + $0xc0] sm:$0xff] %vm2533, %v2506
      %2560 = vst.msk [vmem:[%s116 + $0xc8] sm:$0xff] %vm2533, %v2507
      %2561 = vst.msk [vmem:[%s116 + $0xd0] sm:$0x1] %vm2536, %v2508
      %2562 = vst.msk [vmem:[%s116 + $0xd8] sm:$0xff] %vm2533, %v2509
      %2563 = vst.msk [vmem:[%s116 + $0xe0] sm:$0xff] %vm2533, %v2510
      %2564 = vst.msk [vmem:[%s116 + $0xe8] sm:$0x1] %vm2536, %v2511
      %2565 = vst.msk [vmem:[%s116 + $0xf0] sm:$0xff] %vm2533, %v2512
      %2566 = vst.msk [vmem:[%s116 + $0xf8] sm:$0xff] %vm2533, %v2513
      %2567 = vst.msk [vmem:[%s116 + $0x100] sm:$0x1] %vm2536, %v2514
      %2568 = vst.msk [vmem:[%s116 + $0x108] sm:$0xff] %vm2533, %v2515
      %2569 = vst.msk [vmem:[%s116 + $0x110] sm:$0xff] %vm2533, %v2516
      %2570 = vst.msk [vmem:[%s116 + $0x118] sm:$0x1] %vm2536, %v2517
      %2571 = vst.msk [vmem:[%s116 + $0x120] sm:$0xff] %vm2533, %v2518
      %2572 = vst.msk [vmem:[%s116 + $0x128] sm:$0xff] %vm2533, %v2519
      %2573 = vst.msk [vmem:[%s116 + $0x130] sm:$0x1] %vm2536, %v2520
      %2574 = vst.msk [vmem:[%s116 + $0x138] sm:$0xff] %vm2533, %v2521
      %2575 = vst.msk [vmem:[%s116 + $0x140] sm:$0xff] %vm2533, %v2522
      %2576 = vst.msk [vmem:[%s116 + $0x148] sm:$0x1] %vm2536, %v2523
      %2577 = vst.msk [vmem:[%s116 + $0x150] sm:$0xff] %vm2533, %v2524
      %2578 = vst.msk [vmem:[%s116 + $0x158] sm:$0xff] %vm2533, %v2525
      %2579 = vst.msk [vmem:[%s116 + $0x160] sm:$0x1] %vm2536, %v2526
      %2580 = vst.msk [vmem:[%s116 + $0x168] sm:$0xff] %vm2533, %v2527
      %2581 = vst.msk [vmem:[%s116 + $0x170] sm:$0xff] %vm2533, %v2528
      %2582 = vst.msk [vmem:[%s116 + $0x178] sm:$0x1] %vm2536, %v2529
      %2583 = vst.msk [vmem:[%s116 + $0x180] sm:$0xff] %vm2533, %v2530
      %2584 = vst.msk [vmem:[%s116 + $0x188] sm:$0xff] %vm2533, %v2531
      %2585 = vst.msk [vmem:[%s116 + $0x190] sm:$0x1] %vm2536, %v2532
      %p2586 = scmp.lt.s32.totalorder %s12, 1
      %s2587 = scalar_select %p2586, %s12, 1
      %s2588 = smul.addr %s2587, 51
      %s2589 = smul.addr %s2588, 8
      %s2590 = scalar_lea.vmem %s1, %s2589
      // Predicated region
      $region25: #{tpu_custom_call.1} parent=23 // pred_check
        %p2591 = pneg %p56
      $region26: #{tpu_custom_call.1} parent=23 // pred_check_branch
        %2593 = sbr.rel (%p2591) target = $region28
      $region27: #{tpu_custom_call.1} parent=23 // pred_region
        _
      $region28: #{tpu_custom_call.1} parent=23 // pred_fallthru
        _
    $region24: #{tpu_custom_call.1} parent=5 // pred_fallthru
      _
    %p2594 = scmp.le.s32.totalorder 2, %s7
    // Predicated region
    $region29: #{tpu_custom_call.1} parent=5 // pred_check
      %p2595 = pneg %p2594
    $region30: #{tpu_custom_call.1} parent=5 // pred_check_branch
      %2597 = sbr.rel (%p2595) target = $region32
    $region31: #{tpu_custom_call.1} parent=5 // pred_region
      %s2598 = ssub.s32 %s7, 2
      // Predicated region
      $region33: #{tpu_custom_call.1} parent=31 // pred_check
        %p2599 = pneg %p62
      $region34: #{tpu_custom_call.1} parent=31 // pred_check_branch
        %2601 = sbr.rel (%p2599) target = $region36
      $region35: #{tpu_custom_call.1} parent=31 // pred_region
        %p2602 = scmp.lt.s32.totalorder %s13, 1
        %s2603 = scalar_select %p2602, %s13, 1
        %s2604 = smul.addr %s2603, 51
        %s2605 = smul.addr %s2604, 8
        %s2606 = scalar_lea.vmem %s1, %s2605
      $region36: #{tpu_custom_call.1} parent=31 // pred_fallthru
        _
    $region32: #{tpu_custom_call.1} parent=5 // pred_fallthru
      _
  $region6: #{tpu_custom_call.1} parent=0 // loop_footer
    %s11 = sadd.s32 1, %s7
  $region7: #{tpu_custom_call.1} parent=0 // loop_footer_branch
    %6 = sbr.rel target = $region3
  $region8: #{tpu_custom_call.1} parent=0 // loop_exit
    _

</llo_original>
